<compile_context>
chip_gen: v7x
topology: tpu7x:2x2x1
jax: 0.10.0
libtpu: 0.0.40
codegen_flags: <defaults>
</compile_context>

<pallas_src>
import math

import jax
import jax.numpy as jnp
from jax import lax
from jax.experimental import pallas as pl
from jax.experimental.pallas import tpu as pltpu


def _make_rnn_kernel(layer_dim, seq, bblk, hidden_dim, out_pad, input_dim,
                     compute_dtype, unroll, use_h_scratch):
    # Weight refs, in order:
    #   w_ih0^T, w_hh0^T, (b_ih0+b_hh0),
    #   for l in 1..L-1:  [w_ih_l^T ; w_hh_l^T]  (2H,H),  (b_ih_l+b_hh_l),
    #   fc_w^T padded to (H, out_pad),  fc_b padded to (1, out_pad)
    n_w = 3 + 2 * (layer_dim - 1) + 2

    def kernel(x_ref, *refs):
        w = refs[:n_w]
        out_ref = refs[n_w]          # (seq, bblk, out_pad)
        buf_ref = refs[n_w + 1]      # (seq*bblk, hidden): x-proj, then top-layer hiddens
        h_ref = refs[n_w + 2] if use_h_scratch else None  # (layer_dim, bblk, hidden)

        # --- Loop-invariant loads / broadcasts, hoisted out of the time loop ---
        w_ih0 = w[0][...]                       # (input_dim, hidden)  compute_dtype
        w_hh0 = w[1][...]                       # (hidden, hidden)     compute_dtype
        b0 = w[2][...]                          # (1, hidden)          f32
        fused_w = [w[3 + 2 * (l - 1)][...] for l in range(1, layer_dim)]       # (2H, H)
        fused_b = [jnp.broadcast_to(w[4 + 2 * (l - 1)][...], (bblk, hidden_dim))
                   for l in range(1, layer_dim)]                               # (bblk, H) f32
        fc_w = w[n_w - 2][...]                  # (hidden, out_pad)    compute_dtype
        fc_b = w[n_w - 1][...]                  # (1, out_pad)         f32

        # --- Hoisted layer-0 input projection over ALL timesteps (one MXU matmul) ---
        x_flat = x_ref[...].reshape(seq * bblk, input_dim).astype(compute_dtype)
        buf_ref[...] = jnp.dot(x_flat, w_ih0, preferred_element_type=jnp.float32) + b0

        if use_h_scratch:
            h_ref[...] = jnp.zeros_like(h_ref)

        # --- Sequential recurrence over time ---
        def step(t, h):
            row = pl.multiple_of(t * bblk, 8)
            xp = buf_ref[pl.ds(row, bblk), :]               # W_ih0 x_t + b0   (f32)

            h_prev0 = h_ref[0] if use_h_scratch else h[0]
            pre = xp + jnp.dot(h_prev0.astype(compute_dtype), w_hh0,
                               preferred_element_type=jnp.float32)
            cur = jnp.tanh(pre)
            if use_h_scratch:
                h_ref[0] = cur
            new_h = [cur]

            for l in range(1, layer_dim):
                h_prev = h_ref[l] if use_h_scratch else h[l]
                lhs = jnp.concatenate([cur, h_prev], axis=-1).astype(compute_dtype)
                pre = (jnp.dot(lhs, fused_w[l - 1], preferred_element_type=jnp.float32)
                       + fused_b[l - 1])
                cur = jnp.tanh(pre)
                if use_h_scratch:
                    h_ref[l] = cur
                new_h.append(cur)

            # Overwrite this step's xp rows with the top-layer hidden (read-before-write).
            buf_ref[pl.ds(row, bblk), :] = cur
            return None if use_h_scratch else tuple(new_h)

        init = None if use_h_scratch else tuple(
            jnp.zeros((bblk, hidden_dim), jnp.float32) for _ in range(layer_dim))
        lax.fori_loop(0, seq, step, init, unroll=unroll)

        # --- FC + sigmoid once over all timesteps; lane-dense (out_pad = k*128) store ---
        logits = (jnp.dot(buf_ref[...].astype(compute_dtype), fc_w,
                          preferred_element_type=jnp.float32) + fc_b)
        out_ref[...] = jax.nn.sigmoid(logits).reshape(seq, bblk, out_pad)

    return kernel


def rnn_model_forward(x, params, *, layer_dim, hidden_dim, output_dim,
                      batch_block=None, param_dtype=jnp.bfloat16):
    """x: (batch, seq, input_dim) float32, batch_first like the PyTorch module."""
    batch, seq, input_dim = x.shape
    x = x.astype(jnp.float32)

    # Pad batch to a sublane (8) multiple. Generation-aware blocking: never split the
    # batch below 256 rows (splitting only serializes work on 1-TC v5e/v6e); larger
    # batches use 256-row blocks on a "parallel" grid axis (v7x 2-TC split, MXU-full rows).
    batch_p = -(-batch // 8) * 8
    if batch_block is None:
        batch_block = batch_p if batch_p <= 256 else 256
    assert batch_block % 8 == 0
    batch_p = -(-batch_p // batch_block) * batch_block
    num_blocks = batch_p // batch_block

    # Time-major view (+ batch pad only when needed) — single fused pre-pass over x.
    x_tm = jnp.transpose(x, (1, 0, 2))
    if batch_p != batch:
        x_tm = jnp.pad(x_tm, ((0, 0), (0, batch_p - batch), (0, 0)))

    out_pad = -(-output_dim // 128) * 128     # lane-dense output width

    weight_args = []
    in_specs = [pl.BlockSpec((seq, batch_block, input_dim), lambda b: (0, b, 0))]

    def add_weight(arr, dtype):
        arr = jnp.asarray(arr, dtype)
        weight_args.append(arr)
        in_specs.append(pl.BlockSpec(arr.shape, lambda b: (0, 0)))  # grid-invariant block

    # Layer 0: hoisted input projection keeps w_ih0 separate; bias folded into it.
    w_ih, w_hh, b_ih, b_hh = params["l0"]
    add_weight(w_ih.T, param_dtype)                                  # (in, H)
    add_weight(w_hh.T, param_dtype)                                  # (H, H)
    add_weight((b_ih + b_hh).reshape(1, -1), jnp.float32)            # (1, H)
    # Layers 1..L-1: fuse ih/hh into one (2H, H) RHS -> single K=2H dot per step.
    for l in range(1, layer_dim):
        w_ih, w_hh, b_ih, b_hh = params[f"l{l}"]
        add_weight(jnp.concatenate([w_ih.T, w_hh.T], axis=0), param_dtype)   # (2H, H)
        add_weight((b_ih + b_hh).reshape(1, -1), jnp.float32)                # (1, H)
    # FC padded to lane-dense output columns (sliced back after the call).
    fc_w, fc_b = params["fc"]
    add_weight(jnp.pad(fc_w.T, ((0, 0), (0, out_pad - output_dim))), param_dtype)
    add_weight(jnp.pad(fc_b.reshape(1, -1), ((0, 0), (0, out_pad - output_dim))),
               jnp.float32)

    # Hidden state: register carry when tiny, VMEM scratch once it would spill vregs.
    use_h_scratch = layer_dim * batch_block * hidden_dim * 4 > (128 << 10)
    scratch_shapes = [pltpu.VMEM((seq * batch_block, hidden_dim), jnp.float32)]
    if use_h_scratch:
        scratch_shapes.append(pltpu.VMEM((layer_dim, batch_block, hidden_dim), jnp.float32))

    # Modest partial unroll for long sequences; full unroll for short ones.
    unroll = True if seq <= 16 else 4

    # Explicit VMEM budget: double-buffered x/out blocks + weights + scratch + headroom.
    xbytes = seq * batch_block * input_dim * 4
    obytes = seq * batch_block * out_pad * 4
    wbytes = sum(int(a.size) * a.dtype.itemsize for a in weight_args)
    sbytes = sum(seq * batch_block * hidden_dim * 4 for _ in range(1))
    if use_h_scratch:
        sbytes += layer_dim * batch_block * hidden_dim * 4
    vmem_bytes = 2 * (xbytes + obytes) + 2 * wbytes + sbytes + (8 << 20)
    vmem_bytes = int(min(max(vmem_bytes, 16 << 20), 64 << 20))

    out_tm = pl.pallas_call(
        _make_rnn_kernel(layer_dim, seq, batch_block, hidden_dim, out_pad, input_dim,
                         param_dtype, unroll, use_h_scratch),
        out_shape=jax.ShapeDtypeStruct((seq, batch_p, out_pad), jnp.float32),
        grid=(num_blocks,),
        in_specs=in_specs,
        out_specs=pl.BlockSpec((seq, batch_block, out_pad), lambda b: (0, b, 0)),
        scratch_shapes=scratch_shapes,
        compiler_params=pltpu.CompilerParams(
            dimension_semantics=("parallel",),
            vmem_limit_bytes=vmem_bytes,
        ),
    )(x_tm, *weight_args)

    # Back to PyTorch's (batch, seq, output_dim); drop batch + lane padding.
    return jnp.transpose(out_tm, (1, 0, 2))[:batch, :, :output_dim]


def init_params(key, input_dim, hidden_dim, layer_dim, output_dim):
    """Deterministic init matching PyTorch nn.RNN / nn.Linear parameter shapes."""
    params = {}
    k = 1.0 / math.sqrt(hidden_dim)
    for l in range(layer_dim):
        in_l = input_dim if l == 0 else hidden_dim
        key, k1, k2, k3, k4 = jax.random.split(key, 5)
        params[f"l{l}"] = (
            jax.random.uniform(k1, (hidden_dim, in_l), jnp.float32, -k, k),        # weight_ih_l{l}
            jax.random.uniform(k2, (hidden_dim, hidden_dim), jnp.float32, -k, k),  # weight_hh_l{l}
            jax.random.uniform(k3, (hidden_dim,), jnp.float32, -k, k),             # bias_ih_l{l}
            jax.random.uniform(k4, (hidden_dim,), jnp.float32, -k, k),             # bias_hh_l{l}
        )
    key, k1, k2 = jax.random.split(key, 3)
    params["fc"] = (
        jax.random.uniform(k1, (output_dim, hidden_dim), jnp.float32, -k, k),      # fc.weight
        jax.random.uniform(k2, (output_dim,), jnp.float32, -k, k),                 # fc.bias
    )
    return params


def reference_forward(x, params, layer_dim):
    """Pure-JAX reference of the PyTorch forward, for verification."""
    batch, seq, _ = x.shape
    hidden = params["l0"][1].shape[0]
    h = [jnp.zeros((batch, hidden), jnp.float32) for _ in range(layer_dim)]
    outs = []
    for t in range(seq):
        inp = x[:, t, :]
        for l in range(layer_dim):
            w_ih, w_hh, b_ih, b_hh = params[f"l{l}"]
            h[l] = jnp.tanh(inp @ w_ih.T + b_ih + h[l] @ w_hh.T + b_hh)
            inp = h[l]
        outs.append(inp)
    out = jnp.stack(outs, axis=1)  # (batch, seq, hidden)
    fc_w, fc_b = params["fc"]
    return jax.nn.sigmoid(out @ fc_w.T + fc_b)


if __name__ == "__main__":
    input_dim, hidden_dim, layer_dim, output_dim = 32, 128, 2, 16

    key = jax.random.PRNGKey(0)
    key, xk = jax.random.split(key)
    params = init_params(key, input_dim, hidden_dim, layer_dim, output_dim)

    # Run 1: small batch, f32 weights — tight check against the pure-JAX reference.
    batch, seq = 8, 8
    x = jax.random.normal(xk, (batch, seq, input_dim), jnp.float32)
    res = rnn_model_forward(x, params, layer_dim=layer_dim, hidden_dim=hidden_dim,
                            output_dim=output_dim, param_dtype=jnp.float32)
    res = jax.block_until_ready(res)
    ref = reference_forward(x, params, layer_dim)
    assert res.shape == (batch, seq, output_dim)
    err = float(jnp.max(jnp.abs(res - ref)))
    assert jnp.allclose(res, ref, atol=2e-3, rtol=2e-3), f"f32 max abs err {err}"

    # Run 2: non-multiple-of-8 batch (exercises batch padding + VMEM-resident hidden
    # state) with bf16 weights + bf16 matmul LHS (MXU fast path), f32 accumulation.
    batch2 = 130
    key, xk2 = jax.random.split(key)
    x2 = jax.random.normal(xk2, (batch2, seq, input_dim), jnp.float32)
    res2 = rnn_model_forward(x2, params, layer_dim=layer_dim, hidden_dim=hidden_dim,
                             output_dim=output_dim, param_dtype=jnp.bfloat16)
    res2 = jax.block_until_ready(res2)
    ref2 = reference_forward(x2, params, layer_dim)
    assert res2.shape == (batch2, seq, output_dim)
    err2 = float(jnp.max(jnp.abs(res2 - ref2)))
    assert jnp.allclose(res2, ref2, atol=5e-2, rtol=5e-2), f"bf16 max abs err {err2}"

    print("KERNEL_OK")
</pallas_src>

<mosaic_0001>
module attributes {stable_mosaic.version = 11 : i64} {
  func.func @kernel(%arg0: i32, %arg1: memref<8x8x32xf32, #tpu.memory_space<vmem>>, %arg2: memref<32x128xf32, #tpu.memory_space<vmem>>, %arg3: memref<128x128xf32, #tpu.memory_space<vmem>>, %arg4: memref<1x128xf32, #tpu.memory_space<vmem>>, %arg5: memref<256x128xf32, #tpu.memory_space<vmem>>, %arg6: memref<1x128xf32, #tpu.memory_space<vmem>>, %arg7: memref<128x128xf32, #tpu.memory_space<vmem>>, %arg8: memref<1x128xf32, #tpu.memory_space<vmem>>, %arg9: memref<8x8x128xf32, #tpu.memory_space<vmem>>, %arg10: memref<64x128xf32, #tpu.memory_space<vmem>>) attributes {dimension_semantics = [#tpu.dimension_semantics<parallel>], iteration_bounds = array<i64: 1>, scalar_prefetch = 0 : i64, scratch_operands = 1 : i64, tpu.core_type = #tpu.core_type<tc>, window_params = [{transform_indices = @transform_0, window_bounds = array<i64: 8, 8, 32>}, {pipeline_mode = #tpu.pipeline_mode<synchronous>, transform_indices = @transform_1, window_bounds = array<i64: 32, 128>}, {pipeline_mode = #tpu.pipeline_mode<synchronous>, transform_indices = @transform_2, window_bounds = array<i64: 128, 128>}, {pipeline_mode = #tpu.pipeline_mode<synchronous>, transform_indices = @transform_3, window_bounds = array<i64: 1, 128>}, {pipeline_mode = #tpu.pipeline_mode<synchronous>, transform_indices = @transform_4, window_bounds = array<i64: 256, 128>}, {pipeline_mode = #tpu.pipeline_mode<synchronous>, transform_indices = @transform_5, window_bounds = array<i64: 1, 128>}, {pipeline_mode = #tpu.pipeline_mode<synchronous>, transform_indices = @transform_6, window_bounds = array<i64: 128, 128>}, {pipeline_mode = #tpu.pipeline_mode<synchronous>, transform_indices = @transform_7, window_bounds = array<i64: 1, 128>}, {transform_indices = @transform_8, window_bounds = array<i64: 8, 8, 128>}]} {
    %c0 = arith.constant 0 : index
    %c0_0 = arith.constant 0 : index
    %0 = vector.load %arg2[%c0, %c0_0] : memref<32x128xf32, #tpu.memory_space<vmem>>, vector<32x128xf32>
    %c0_1 = arith.constant 0 : index
    %c0_2 = arith.constant 0 : index
    %1 = vector.load %arg3[%c0_1, %c0_2] : memref<128x128xf32, #tpu.memory_space<vmem>>, vector<128x128xf32>
    %c0_3 = arith.constant 0 : index
    %c0_4 = arith.constant 0 : index
    %2 = vector.load %arg4[%c0_3, %c0_4] : memref<1x128xf32, #tpu.memory_space<vmem>>, vector<1x128xf32>
    %c0_5 = arith.constant 0 : index
    %c0_6 = arith.constant 0 : index
    %3 = vector.load %arg5[%c0_5, %c0_6] : memref<256x128xf32, #tpu.memory_space<vmem>>, vector<256x128xf32>
    %c0_7 = arith.constant 0 : index
    %c0_8 = arith.constant 0 : index
    %4 = vector.load %arg6[%c0_7, %c0_8] : memref<1x128xf32, #tpu.memory_space<vmem>>, vector<1x128xf32>
    %5 = vector.shape_cast %4 : vector<1x128xf32> to vector<1x128xf32>
    %6 = vector.broadcast %5 : vector<1x128xf32> to vector<8x128xf32>
    %c0_9 = arith.constant 0 : index
    %c0_10 = arith.constant 0 : index
    %7 = vector.load %arg7[%c0_9, %c0_10] : memref<128x128xf32, #tpu.memory_space<vmem>>, vector<128x128xf32>
    %c0_11 = arith.constant 0 : index
    %c0_12 = arith.constant 0 : index
    %8 = vector.load %arg8[%c0_11, %c0_12] : memref<1x128xf32, #tpu.memory_space<vmem>>, vector<1x128xf32>
    %c0_13 = arith.constant 0 : index
    %c0_14 = arith.constant 0 : index
    %c0_15 = arith.constant 0 : index
    %9 = vector.load %arg1[%c0_13, %c0_14, %c0_15] : memref<8x8x32xf32, #tpu.memory_space<vmem>>, vector<8x8x32xf32>
    %10 = vector.shape_cast %9 : vector<8x8x32xf32> to vector<64x32xf32>
    %cst = arith.constant dense<0.000000e+00> : vector<64x128xf32>
    %11 = tpu.matmul %10, %0, %cst {dimension_numbers = #tpu.dot_dimension_numbers<[1], [0], [0], [1], [0, 0, 1, 1], [], []>} : vector<64x32xf32>, vector<32x128xf32>, vector<64x128xf32> -> vector<64x128xf32>
    %12 = vector.broadcast %2 : vector<1x128xf32> to vector<64x128xf32>
    %13 = arith.addf %11, %12 : vector<64x128xf32>
    %c0_16 = arith.constant 0 : index
    %c0_17 = arith.constant 0 : index
    %14 = vector.load %arg10[%c0_16, %c0_17] : memref<64x128xf32, #tpu.memory_space<vmem>>, vector<64x128xf32>
    tpu.vector_store %arg10[%c0_16, %c0_17], %13 {strides = array<i32>} : memref<64x128xf32, #tpu.memory_space<vmem>>, vector<64x128xf32>,
    %cst_18 = arith.constant 0.000000e+00 : f32
    %15 = vector.broadcast %cst_18 : f32 to vector<8x128xf32>
    %cst_19 = arith.constant 0.000000e+00 : f32
    %16 = vector.broadcast %cst_19 : f32 to vector<8x128xf32>
    %c0_i32 = arith.constant 0 : i32
    %c8_i32 = arith.constant 8 : i32
    %17 = arith.muli %c0_i32, %c8_i32 : i32
    %18 = tpu.assume_multiple %17, 8 : i32
    %19 = arith.index_cast %18 : i32 to index
    %c0_20 = arith.constant 0 : index
    %20 = vector.load %arg10[%19, %c0_20] : memref<64x128xf32, #tpu.memory_space<vmem>>, vector<8x128xf32>
    %cst_21 = arith.constant dense<0.000000e+00> : vector<8x128xf32>
    %21 = tpu.matmul %15, %1, %cst_21 {dimension_numbers = #tpu.dot_dimension_numbers<[1], [0], [0], [1], [0, 0, 1, 1], [], []>} : vector<8x128xf32>, vector<128x128xf32>, vector<8x128xf32> -> vector<8x128xf32>
    %22 = arith.addf %20, %21 : vector<8x128xf32>
    %23 = math.tanh %22 : vector<8x128xf32>
    %24 = tpu.concatenate %23, %16 in 1 : vector<8x128xf32>, vector<8x128xf32> -> vector<8x256xf32>
    %cst_22 = arith.constant dense<0.000000e+00> : vector<8x128xf32>
    %25 = tpu.matmul %24, %3, %cst_22 {dimension_numbers = #tpu.dot_dimension_numbers<[1], [0], [0], [1], [0, 0, 1, 1], [], []>} : vector<8x256xf32>, vector<256x128xf32>, vector<8x128xf32> -> vector<8x128xf32>
    %26 = arith.addf %25, %6 : vector<8x128xf32>
    %27 = math.tanh %26 : vector<8x128xf32>
    %28 = arith.index_cast %18 : i32 to index
    %c0_23 = arith.constant 0 : index
    %29 = vector.load %arg10[%28, %c0_23] : memref<64x128xf32, #tpu.memory_space<vmem>>, vector<8x128xf32>
    tpu.vector_store %arg10[%28, %c0_23], %27 {strides = array<i32>} : memref<64x128xf32, #tpu.memory_space<vmem>>, vector<8x128xf32>,
    %c1_i32 = arith.constant 1 : i32
    %c8_i32_24 = arith.constant 8 : i32
    %30 = arith.muli %c1_i32, %c8_i32_24 : i32
    %31 = tpu.assume_multiple %30, 8 : i32
    %32 = arith.index_cast %31 : i32 to index
    %c0_25 = arith.constant 0 : index
    %33 = vector.load %arg10[%32, %c0_25] : memref<64x128xf32, #tpu.memory_space<vmem>>, vector<8x128xf32>
    %cst_26 = arith.constant dense<0.000000e+00> : vector<8x128xf32>
    %34 = tpu.matmul %23, %1, %cst_26 {dimension_numbers = #tpu.dot_dimension_numbers<[1], [0], [0], [1], [0, 0, 1, 1], [], []>} : vector<8x128xf32>, vector<128x128xf32>, vector<8x128xf32> -> vector<8x128xf32>
    %35 = arith.addf %33, %34 : vector<8x128xf32>
    %36 = math.tanh %35 : vector<8x128xf32>
    %37 = tpu.concatenate %36, %27 in 1 : vector<8x128xf32>, vector<8x128xf32> -> vector<8x256xf32>
    %cst_27 = arith.constant dense<0.000000e+00> : vector<8x128xf32>
    %38 = tpu.matmul %37, %3, %cst_27 {dimension_numbers = #tpu.dot_dimension_numbers<[1], [0], [0], [1], [0, 0, 1, 1], [], []>} : vector<8x256xf32>, vector<256x128xf32>, vector<8x128xf32> -> vector<8x128xf32>
    %39 = arith.addf %38, %6 : vector<8x128xf32>
    %40 = math.tanh %39 : vector<8x128xf32>
    %41 = arith.index_cast %31 : i32 to index
    %c0_28 = arith.constant 0 : index
    %42 = vector.load %arg10[%41, %c0_28] : memref<64x128xf32, #tpu.memory_space<vmem>>, vector<8x128xf32>
    tpu.vector_store %arg10[%41, %c0_28], %40 {strides = array<i32>} : memref<64x128xf32, #tpu.memory_space<vmem>>, vector<8x128xf32>,
    %c2_i32 = arith.constant 2 : i32
    %c8_i32_29 = arith.constant 8 : i32
    %43 = arith.muli %c2_i32, %c8_i32_29 : i32
    %44 = tpu.assume_multiple %43, 8 : i32
    %45 = arith.index_cast %44 : i32 to index
    %c0_30 = arith.constant 0 : index
    %46 = vector.load %arg10[%45, %c0_30] : memref<64x128xf32, #tpu.memory_space<vmem>>, vector<8x128xf32>
    %cst_31 = arith.constant dense<0.000000e+00> : vector<8x128xf32>
    %47 = tpu.matmul %36, %1, %cst_31 {dimension_numbers = #tpu.dot_dimension_numbers<[1], [0], [0], [1], [0, 0, 1, 1], [], []>} : vector<8x128xf32>, vector<128x128xf32>, vector<8x128xf32> -> vector<8x128xf32>
    %48 = arith.addf %46, %47 : vector<8x128xf32>
    %49 = math.tanh %48 : vector<8x128xf32>
    %50 = tpu.concatenate %49, %40 in 1 : vector<8x128xf32>, vector<8x128xf32> -> vector<8x256xf32>
    %cst_32 = arith.constant dense<0.000000e+00> : vector<8x128xf32>
    %51 = tpu.matmul %50, %3, %cst_32 {dimension_numbers = #tpu.dot_dimension_numbers<[1], [0], [0], [1], [0, 0, 1, 1], [], []>} : vector<8x256xf32>, vector<256x128xf32>, vector<8x128xf32> -> vector<8x128xf32>
    %52 = arith.addf %51, %6 : vector<8x128xf32>
    %53 = math.tanh %52 : vector<8x128xf32>
    %54 = arith.index_cast %44 : i32 to index
    %c0_33 = arith.constant 0 : index
    %55 = vector.load %arg10[%54, %c0_33] : memref<64x128xf32, #tpu.memory_space<vmem>>, vector<8x128xf32>
    tpu.vector_store %arg10[%54, %c0_33], %53 {strides = array<i32>} : memref<64x128xf32, #tpu.memory_space<vmem>>, vector<8x128xf32>,
    %c3_i32 = arith.constant 3 : i32
    %c8_i32_34 = arith.constant 8 : i32
    %56 = arith.muli %c3_i32, %c8_i32_34 : i32
    %57 = tpu.assume_multiple %56, 8 : i32
    %58 = arith.index_cast %57 : i32 to index
    %c0_35 = arith.constant 0 : index
    %59 = vector.load %arg10[%58, %c0_35] : memref<64x128xf32, #tpu.memory_space<vmem>>, vector<8x128xf32>
    %cst_36 = arith.constant dense<0.000000e+00> : vector<8x128xf32>
    %60 = tpu.matmul %49, %1, %cst_36 {dimension_numbers = #tpu.dot_dimension_numbers<[1], [0], [0], [1], [0, 0, 1, 1], [], []>} : vector<8x128xf32>, vector<128x128xf32>, vector<8x128xf32> -> vector<8x128xf32>
    %61 = arith.addf %59, %60 : vector<8x128xf32>
    %62 = math.tanh %61 : vector<8x128xf32>
    %63 = tpu.concatenate %62, %53 in 1 : vector<8x128xf32>, vector<8x128xf32> -> vector<8x256xf32>
    %cst_37 = arith.constant dense<0.000000e+00> : vector<8x128xf32>
    %64 = tpu.matmul %63, %3, %cst_37 {dimension_numbers = #tpu.dot_dimension_numbers<[1], [0], [0], [1], [0, 0, 1, 1], [], []>} : vector<8x256xf32>, vector<256x128xf32>, vector<8x128xf32> -> vector<8x128xf32>
    %65 = arith.addf %64, %6 : vector<8x128xf32>
    %66 = math.tanh %65 : vector<8x128xf32>
    %67 = arith.index_cast %57 : i32 to index
    %c0_38 = arith.constant 0 : index
    %68 = vector.load %arg10[%67, %c0_38] : memref<64x128xf32, #tpu.memory_space<vmem>>, vector<8x128xf32>
    tpu.vector_store %arg10[%67, %c0_38], %66 {strides = array<i32>} : memref<64x128xf32, #tpu.memory_space<vmem>>, vector<8x128xf32>,
    %c4_i32 = arith.constant 4 : i32
    %c8_i32_39 = arith.constant 8 : i32
    %69 = arith.muli %c4_i32, %c8_i32_39 : i32
    %70 = tpu.assume_multiple %69, 8 : i32
    %71 = arith.index_cast %70 : i32 to index
    %c0_40 = arith.constant 0 : index
    %72 = vector.load %arg10[%71, %c0_40] : memref<64x128xf32, #tpu.memory_space<vmem>>, vector<8x128xf32>
    %cst_41 = arith.constant dense<0.000000e+00> : vector<8x128xf32>
    %73 = tpu.matmul %62, %1, %cst_41 {dimension_numbers = #tpu.dot_dimension_numbers<[1], [0], [0], [1], [0, 0, 1, 1], [], []>} : vector<8x128xf32>, vector<128x128xf32>, vector<8x128xf32> -> vector<8x128xf32>
    %74 = arith.addf %72, %73 : vector<8x128xf32>
    %75 = math.tanh %74 : vector<8x128xf32>
    %76 = tpu.concatenate %75, %66 in 1 : vector<8x128xf32>, vector<8x128xf32> -> vector<8x256xf32>
    %cst_42 = arith.constant dense<0.000000e+00> : vector<8x128xf32>
    %77 = tpu.matmul %76, %3, %cst_42 {dimension_numbers = #tpu.dot_dimension_numbers<[1], [0], [0], [1], [0, 0, 1, 1], [], []>} : vector<8x256xf32>, vector<256x128xf32>, vector<8x128xf32> -> vector<8x128xf32>
    %78 = arith.addf %77, %6 : vector<8x128xf32>
    %79 = math.tanh %78 : vector<8x128xf32>
    %80 = arith.index_cast %70 : i32 to index
    %c0_43 = arith.constant 0 : index
    %81 = vector.load %arg10[%80, %c0_43] : memref<64x128xf32, #tpu.memory_space<vmem>>, vector<8x128xf32>
    tpu.vector_store %arg10[%80, %c0_43], %79 {strides = array<i32>} : memref<64x128xf32, #tpu.memory_space<vmem>>, vector<8x128xf32>,
    %c5_i32 = arith.constant 5 : i32
    %c8_i32_44 = arith.constant 8 : i32
    %82 = arith.muli %c5_i32, %c8_i32_44 : i32
    %83 = tpu.assume_multiple %82, 8 : i32
    %84 = arith.index_cast %83 : i32 to index
    %c0_45 = arith.constant 0 : index
    %85 = vector.load %arg10[%84, %c0_45] : memref<64x128xf32, #tpu.memory_space<vmem>>, vector<8x128xf32>
    %cst_46 = arith.constant dense<0.000000e+00> : vector<8x128xf32>
    %86 = tpu.matmul %75, %1, %cst_46 {dimension_numbers = #tpu.dot_dimension_numbers<[1], [0], [0], [1], [0, 0, 1, 1], [], []>} : vector<8x128xf32>, vector<128x128xf32>, vector<8x128xf32> -> vector<8x128xf32>
    %87 = arith.addf %85, %86 : vector<8x128xf32>
    %88 = math.tanh %87 : vector<8x128xf32>
    %89 = tpu.concatenate %88, %79 in 1 : vector<8x128xf32>, vector<8x128xf32> -> vector<8x256xf32>
    %cst_47 = arith.constant dense<0.000000e+00> : vector<8x128xf32>
    %90 = tpu.matmul %89, %3, %cst_47 {dimension_numbers = #tpu.dot_dimension_numbers<[1], [0], [0], [1], [0, 0, 1, 1], [], []>} : vector<8x256xf32>, vector<256x128xf32>, vector<8x128xf32> -> vector<8x128xf32>
    %91 = arith.addf %90, %6 : vector<8x128xf32>
    %92 = math.tanh %91 : vector<8x128xf32>
    %93 = arith.index_cast %83 : i32 to index
    %c0_48 = arith.constant 0 : index
    %94 = vector.load %arg10[%93, %c0_48] : memref<64x128xf32, #tpu.memory_space<vmem>>, vector<8x128xf32>
    tpu.vector_store %arg10[%93, %c0_48], %92 {strides = array<i32>} : memref<64x128xf32, #tpu.memory_space<vmem>>, vector<8x128xf32>,
    %c6_i32 = arith.constant 6 : i32
    %c8_i32_49 = arith.constant 8 : i32
    %95 = arith.muli %c6_i32, %c8_i32_49 : i32
    %96 = tpu.assume_multiple %95, 8 : i32
    %97 = arith.index_cast %96 : i32 to index
    %c0_50 = arith.constant 0 : index
    %98 = vector.load %arg10[%97, %c0_50] : memref<64x128xf32, #tpu.memory_space<vmem>>, vector<8x128xf32>
    %cst_51 = arith.constant dense<0.000000e+00> : vector<8x128xf32>
    %99 = tpu.matmul %88, %1, %cst_51 {dimension_numbers = #tpu.dot_dimension_numbers<[1], [0], [0], [1], [0, 0, 1, 1], [], []>} : vector<8x128xf32>, vector<128x128xf32>, vector<8x128xf32> -> vector<8x128xf32>
    %100 = arith.addf %98, %99 : vector<8x128xf32>
    %101 = math.tanh %100 : vector<8x128xf32>
    %102 = tpu.concatenate %101, %92 in 1 : vector<8x128xf32>, vector<8x128xf32> -> vector<8x256xf32>
    %cst_52 = arith.constant dense<0.000000e+00> : vector<8x128xf32>
    %103 = tpu.matmul %102, %3, %cst_52 {dimension_numbers = #tpu.dot_dimension_numbers<[1], [0], [0], [1], [0, 0, 1, 1], [], []>} : vector<8x256xf32>, vector<256x128xf32>, vector<8x128xf32> -> vector<8x128xf32>
    %104 = arith.addf %103, %6 : vector<8x128xf32>
    %105 = math.tanh %104 : vector<8x128xf32>
    %106 = arith.index_cast %96 : i32 to index
    %c0_53 = arith.constant 0 : index
    %107 = vector.load %arg10[%106, %c0_53] : memref<64x128xf32, #tpu.memory_space<vmem>>, vector<8x128xf32>
    tpu.vector_store %arg10[%106, %c0_53], %105 {strides = array<i32>} : memref<64x128xf32, #tpu.memory_space<vmem>>, vector<8x128xf32>,
    %c7_i32 = arith.constant 7 : i32
    %c8_i32_54 = arith.constant 8 : i32
    %108 = arith.muli %c7_i32, %c8_i32_54 : i32
    %109 = tpu.assume_multiple %108, 8 : i32
    %110 = arith.index_cast %109 : i32 to index
    %c0_55 = arith.constant 0 : index
    %111 = vector.load %arg10[%110, %c0_55] : memref<64x128xf32, #tpu.memory_space<vmem>>, vector<8x128xf32>
    %cst_56 = arith.constant dense<0.000000e+00> : vector<8x128xf32>
    %112 = tpu.matmul %101, %1, %cst_56 {dimension_numbers = #tpu.dot_dimension_numbers<[1], [0], [0], [1], [0, 0, 1, 1], [], []>} : vector<8x128xf32>, vector<128x128xf32>, vector<8x128xf32> -> vector<8x128xf32>
    %113 = arith.addf %111, %112 : vector<8x128xf32>
    %114 = math.tanh %113 : vector<8x128xf32>
    %115 = tpu.concatenate %114, %105 in 1 : vector<8x128xf32>, vector<8x128xf32> -> vector<8x256xf32>
    %cst_57 = arith.constant dense<0.000000e+00> : vector<8x128xf32>
    %116 = tpu.matmul %115, %3, %cst_57 {dimension_numbers = #tpu.dot_dimension_numbers<[1], [0], [0], [1], [0, 0, 1, 1], [], []>} : vector<8x256xf32>, vector<256x128xf32>, vector<8x128xf32> -> vector<8x128xf32>
    %117 = arith.addf %116, %6 : vector<8x128xf32>
    %118 = math.tanh %117 : vector<8x128xf32>
    %119 = arith.index_cast %109 : i32 to index
    %c0_58 = arith.constant 0 : index
    %120 = vector.load %arg10[%119, %c0_58] : memref<64x128xf32, #tpu.memory_space<vmem>>, vector<8x128xf32>
    tpu.vector_store %arg10[%119, %c0_58], %118 {strides = array<i32>} : memref<64x128xf32, #tpu.memory_space<vmem>>, vector<8x128xf32>,
    %c8_i32_59 = arith.constant 8 : i32
    %c0_60 = arith.constant 0 : index
    %c0_61 = arith.constant 0 : index
    %121 = vector.load %arg10[%c0_60, %c0_61] : memref<64x128xf32, #tpu.memory_space<vmem>>, vector<64x128xf32>
    %cst_62 = arith.constant dense<0.000000e+00> : vector<64x128xf32>
    %122 = tpu.matmul %121, %7, %cst_62 {dimension_numbers = #tpu.dot_dimension_numbers<[1], [0], [0], [1], [0, 0, 1, 1], [], []>} : vector<64x128xf32>, vector<128x128xf32>, vector<64x128xf32> -> vector<64x128xf32>
    %123 = vector.broadcast %8 : vector<1x128xf32> to vector<64x128xf32>
    %124 = arith.addf %122, %123 : vector<64x128xf32>
    %125 = arith.negf %124 : vector<64x128xf32>
    %126 = math.exp %125 : vector<64x128xf32>
    %cst_63 = arith.constant 1.000000e+00 : f32
    %127 = vector.broadcast %cst_63 : f32 to vector<64x128xf32>
    %128 = arith.addf %127, %126 : vector<64x128xf32>
    %129 = arith.divf %127, %128 : vector<64x128xf32>
    %130 = vector.shape_cast %129 : vector<64x128xf32> to vector<8x8x128xf32>
    %c0_64 = arith.constant 0 : index
    %c0_65 = arith.constant 0 : index
    %c0_66 = arith.constant 0 : index
    %131 = vector.load %arg9[%c0_64, %c0_65, %c0_66] : memref<8x8x128xf32, #tpu.memory_space<vmem>>, vector<8x8x128xf32>
    tpu.vector_store %arg9[%c0_64, %c0_65, %c0_66], %130 {strides = array<i32>} : memref<8x8x128xf32, #tpu.memory_space<vmem>>, vector<8x8x128xf32>,
    return
  }
  func.func @transform_0(%arg0: i32) -> (i32, i32, i32) {
    %c0_i32 = arith.constant 0 : i32
    %c0_i32_0 = arith.constant 0 : i32
    %c0_i32_1 = arith.constant 0 : i32
    return %c0_i32, %arg0, %c0_i32_0 : i32, i32, i32
  }
  func.func @transform_1(%arg0: i32) -> (i32, i32) {
    %c0_i32 = arith.constant 0 : i32
    %c0_i32_0 = arith.constant 0 : i32
    %c0_i32_1 = arith.constant 0 : i32
    return %c0_i32, %c0_i32_0 : i32, i32
  }
  func.func @transform_2(%arg0: i32) -> (i32, i32) {
    %c0_i32 = arith.constant 0 : i32
    %c0_i32_0 = arith.constant 0 : i32
    %c0_i32_1 = arith.constant 0 : i32
    return %c0_i32, %c0_i32_0 : i32, i32
  }
  func.func @transform_3(%arg0: i32) -> (i32, i32) {
    %c0_i32 = arith.constant 0 : i32
    %c0_i32_0 = arith.constant 0 : i32
    %c0_i32_1 = arith.constant 0 : i32
    return %c0_i32, %c0_i32_0 : i32, i32
  }
  func.func @transform_4(%arg0: i32) -> (i32, i32) {
    %c0_i32 = arith.constant 0 : i32
    %c0_i32_0 = arith.constant 0 : i32
    %c0_i32_1 = arith.constant 0 : i32
    return %c0_i32, %c0_i32_0 : i32, i32
  }
  func.func @transform_5(%arg0: i32) -> (i32, i32) {
    %c0_i32 = arith.constant 0 : i32
    %c0_i32_0 = arith.constant 0 : i32
    %c0_i32_1 = arith.constant 0 : i32
    return %c0_i32, %c0_i32_0 : i32, i32
  }
  func.func @transform_6(%arg0: i32) -> (i32, i32) {
    %c0_i32 = arith.constant 0 : i32
    %c0_i32_0 = arith.constant 0 : i32
    %c0_i32_1 = arith.constant 0 : i32
    return %c0_i32, %c0_i32_0 : i32, i32
  }
  func.func @transform_7(%arg0: i32) -> (i32, i32) {
    %c0_i32 = arith.constant 0 : i32
    %c0_i32_0 = arith.constant 0 : i32
    %c0_i32_1 = arith.constant 0 : i32
    return %c0_i32, %c0_i32_0 : i32, i32
  }
  func.func @transform_8(%arg0: i32) -> (i32, i32, i32) {
    %c0_i32 = arith.constant 0 : i32
    %c0_i32_0 = arith.constant 0 : i32
    %c0_i32_1 = arith.constant 0 : i32
    return %c0_i32, %arg0, %c0_i32_0 : i32, i32, i32
  }
}

</mosaic_0001>

<llo_original>
// kernel: tpu_custom_call.1
$region0: #{tpu_custom_call.1}
  #allocation0 [shape = 'u32[]', space=smem, size = 0x4, offset = 0x4, fixed_abs, tag = 'smem constant byte address 0x4 - core index']
  #allocation1 [shape = 'u32[144,128]{1,0:T(1,128)}', space=vmem, size = 0x12000, scoped, tag = 'internal scratch']
  #allocation2 [shape = 'f32[64,128]{1,0:T(8,128)}', space=vmem, size = 0x8000, scoped, tag = 'scratch operand']
  %s0 = inlined_call_operand.hbm [shape: f32[8,8,32], index: 0, kind: input, shape index: {}]
  %s1 = inlined_call_operand.hbm [shape: f32[32,128], index: 1, kind: input, shape index: {}]
  %s2 = inlined_call_operand.hbm [shape: f32[128,128], index: 2, kind: input, shape index: {}]
  %s3 = inlined_call_operand.vmem [shape: f32[1,128], index: 3, kind: input, shape index: {}]
  %s4 = inlined_call_operand.hbm [shape: f32[256,128], index: 4, kind: input, shape index: {}]
  %s5 = inlined_call_operand.vmem [shape: f32[1,128], index: 5, kind: input, shape index: {}]
  %s6 = inlined_call_operand.hbm [shape: f32[128,128], index: 6, kind: input, shape index: {}]
  %s7 = inlined_call_operand.vmem [shape: f32[1,128], index: 7, kind: input, shape index: {}]
  %s8 = inlined_call_operand.hbm [shape: f32[8,8,128], index: 8, kind: output, shape index: {}]
  %s9 = sld [smem:[#allocation0]]
  $region62: #{tpu_custom_call.1} parent=0
    _
  %s11 = ssub.s32 1, %s9
  %s12 = scalar_select 0, %s11, %s9
  $region1: #{tpu_custom_call.1} parent=0
    #allocation3 [shape = 'u8[32768]{0}', space=vmem, size = 0x8000, scoped, tag = 'input window, operand 0, single buffered']
    #allocation4 [shape = 's32[1]{0}', space=sflag, size = 0x4, scoped, tag = 'scoped memory for tpu_custom_call.1']
    #allocation5 [shape = 's32[1]{0}', space=sflag, size = 0x4, scoped, tag = 'scoped memory for tpu_custom_call.1']
    #allocation6 [shape = 'u8[16384]{0}', space=vmem, size = 0x4000, scoped, tag = 'input window, operand 1, single buffered']
    #allocation7 [shape = 's32[1]{0}', space=sflag, size = 0x4, scoped, tag = 'scoped memory for tpu_custom_call.1']
    #allocation8 [shape = 'u8[65536]{0}', space=vmem, size = 0x10000, scoped, tag = 'input window, operand 2, single buffered']
    #allocation9 [shape = 'u8[131072]{0}', space=vmem, size = 0x20000, scoped, tag = 'input window, operand 4, single buffered']
    #allocation10 [shape = 's32[1]{0}', space=sflag, size = 0x4, scoped, tag = 'scoped memory for tpu_custom_call.1']
    #allocation11 [shape = 'u8[65536]{0}', space=vmem, size = 0x10000, scoped, tag = 'input window, operand 6, single buffered']
    #allocation12 [shape = 'u8[32768]{0}', space=vmem, size = 0x8000, scoped, tag = 'output window, operand 0, single buffered']
    %13 = vsyncpa [#allocation4], 0
    %14 = vsyncpa [#allocation7], 0
    %15 = vsyncpa [#allocation10], 0
    %16 = vsyncpa [#allocation5], 0
    // Predicated region
    $region2: #{tpu_custom_call.1} parent=1 // pred_check
      _
    $region3: #{tpu_custom_call.1} parent=1 // pred_check_branch
      %18 = sbr.rel (0) target = $region5
    $region4: #{tpu_custom_call.1} parent=1 // pred_region
      %s20 = ssub.s32 1024, 1024
      %21 = vsyncadd [#allocation4], %s20
      %s22 = sshll.u32 [#allocation3], 4
      %s23 = int_to_ptr.vmem [resolvable:$true] %s22
      %28 = dma.hbm_to_vmem [thread:$0]  %s0, 1024, %s23, [#allocation4], 128, 128, 8
    $region5: #{tpu_custom_call.1} parent=1 // pred_fallthru
      _
    // Predicated region
    $region6: #{tpu_custom_call.1} parent=1 // pred_check
      _
    $region7: #{tpu_custom_call.1} parent=1 // pred_check_branch
      %30 = sbr.rel (0) target = $region9
    $region8: #{tpu_custom_call.1} parent=1 // pred_region
      %s32 = ssub.s32 512, 512
      %33 = vsyncadd [#allocation7], %s32
      %s34 = sshll.u32 [#allocation6], 4
      %s35 = int_to_ptr.vmem [resolvable:$true] %s34
      %40 = dma.hbm_to_vmem [thread:$0]  %s1, 512, %s35, [#allocation7], 128, 128, 8
    $region9: #{tpu_custom_call.1} parent=1 // pred_fallthru
      _
    // Predicated region
    $region10: #{tpu_custom_call.1} parent=1 // pred_check
      _
    $region11: #{tpu_custom_call.1} parent=1 // pred_check_branch
      %42 = sbr.rel (0) target = $region13
    $region12: #{tpu_custom_call.1} parent=1 // pred_region
      %s44 = ssub.s32 2048, 2048
      %45 = vsyncadd [#allocation7], %s44
      %s46 = sshll.u32 [#allocation8], 4
      %s47 = int_to_ptr.vmem [resolvable:$true] %s46
      %52 = dma.hbm_to_vmem [thread:$0]  %s2, 2048, %s47, [#allocation7], 128, 128, 8
    $region13: #{tpu_custom_call.1} parent=1 // pred_fallthru
      _
    // Predicated region
    $region14: #{tpu_custom_call.1} parent=1 // pred_check
      _
    $region15: #{tpu_custom_call.1} parent=1 // pred_check_branch
      %54 = sbr.rel (0) target = $region17
    $region16: #{tpu_custom_call.1} parent=1 // pred_region
      _
    $region17: #{tpu_custom_call.1} parent=1 // pred_fallthru
      _
    // Predicated region
    $region18: #{tpu_custom_call.1} parent=1 // pred_check
      _
    $region19: #{tpu_custom_call.1} parent=1 // pred_check_branch
      %56 = sbr.rel (0) target = $region21
    $region20: #{tpu_custom_call.1} parent=1 // pred_region
      %s58 = ssub.s32 4096, 4096
      %59 = vsyncadd [#allocation10], %s58
      %s60 = sshll.u32 [#allocation9], 4
      %s61 = int_to_ptr.vmem [resolvable:$true] %s60
      %66 = dma.hbm_to_vmem [thread:$0]  %s4, 4096, %s61, [#allocation10], 128, 128, 8
    $region21: #{tpu_custom_call.1} parent=1 // pred_fallthru
      _
    // Predicated region
    $region22: #{tpu_custom_call.1} parent=1 // pred_check
      _
    $region23: #{tpu_custom_call.1} parent=1 // pred_check_branch
      %68 = sbr.rel (0) target = $region25
    $region24: #{tpu_custom_call.1} parent=1 // pred_region
      _
    $region25: #{tpu_custom_call.1} parent=1 // pred_fallthru
      _
    // Predicated region
    $region26: #{tpu_custom_call.1} parent=1 // pred_check
      _
    $region27: #{tpu_custom_call.1} parent=1 // pred_check_branch
      %70 = sbr.rel (0) target = $region29
    $region28: #{tpu_custom_call.1} parent=1 // pred_region
      %s72 = ssub.s32 2048, 2048
      %73 = vsyncadd [#allocation10], %s72
      %s74 = sshll.u32 [#allocation11], 4
      %s75 = int_to_ptr.vmem [resolvable:$true] %s74
      %80 = dma.hbm_to_vmem [thread:$0]  %s6, 2048, %s75, [#allocation10], 128, 128, 8
    $region29: #{tpu_custom_call.1} parent=1 // pred_fallthru
      _
    // Predicated region
    $region30: #{tpu_custom_call.1} parent=1 // pred_check
      _
    $region31: #{tpu_custom_call.1} parent=1 // pred_check_branch
      %82 = sbr.rel (0) target = $region33
    $region32: #{tpu_custom_call.1} parent=1 // pred_region
      _
    $region33: #{tpu_custom_call.1} parent=1 // pred_fallthru
      _
    // Predicated region
    $region34: #{tpu_custom_call.1} parent=1 // pred_check
      _
    $region35: #{tpu_custom_call.1} parent=1 // pred_check_branch
      %84 = sbr.rel (0) target = $region37
    $region36: #{tpu_custom_call.1} parent=1 // pred_region
      %85 = dma.done [#allocation4], 1024
    $region37: #{tpu_custom_call.1} parent=1 // pred_fallthru
      _
    // Predicated region
    $region38: #{tpu_custom_call.1} parent=1 // pred_check
      _
    $region39: #{tpu_custom_call.1} parent=1 // pred_check_branch
      %87 = sbr.rel (0) target = $region41
    $region40: #{tpu_custom_call.1} parent=1 // pred_region
      %88 = dma.done [#allocation7], 512
    $region41: #{tpu_custom_call.1} parent=1 // pred_fallthru
      _
    // Predicated region
    $region42: #{tpu_custom_call.1} parent=1 // pred_check
      _
    $region43: #{tpu_custom_call.1} parent=1 // pred_check_branch
      %90 = sbr.rel (0) target = $region45
    $region44: #{tpu_custom_call.1} parent=1 // pred_region
      %91 = dma.done [#allocation7], 2048
    $region45: #{tpu_custom_call.1} parent=1 // pred_fallthru
      _
    // Predicated region
    $region46: #{tpu_custom_call.1} parent=1 // pred_check
      _
    $region47: #{tpu_custom_call.1} parent=1 // pred_check_branch
      %93 = sbr.rel (0) target = $region49
    $region48: #{tpu_custom_call.1} parent=1 // pred_region
      %94 = dma.done [#allocation10], 4096
    $region49: #{tpu_custom_call.1} parent=1 // pred_fallthru
      _
    // Predicated region
    $region50: #{tpu_custom_call.1} parent=1 // pred_check
      _
    $region51: #{tpu_custom_call.1} parent=1 // pred_check_branch
      %96 = sbr.rel (0) target = $region53
    $region52: #{tpu_custom_call.1} parent=1 // pred_region
      %97 = dma.done [#allocation10], 2048
    $region53: #{tpu_custom_call.1} parent=1 // pred_fallthru
      _
    %v98 = vld [vmem:[#allocation6] sm:$0xff]
    %v99 = vld [vmem:[#allocation6 + $0x8] sm:$0xff]
    %v100 = vld [vmem:[#allocation6 + $0x10] sm:$0xff]
    %v101 = vld [vmem:[#allocation6 + $0x18] sm:$0xff]
    %v102 = vld [vmem:[#allocation8] sm:$0xff]
    %v103 = vld [vmem:[#allocation8 + $0x8] sm:$0xff]
    %v104 = vld [vmem:[#allocation8 + $0x10] sm:$0xff]
    %v105 = vld [vmem:[#allocation8 + $0x18] sm:$0xff]
    %v106 = vld [vmem:[#allocation8 + $0x20] sm:$0xff]
    %v107 = vld [vmem:[#allocation8 + $0x28] sm:$0xff]
    %v108 = vld [vmem:[#allocation8 + $0x30] sm:$0xff]
    %v109 = vld [vmem:[#allocation8 + $0x38] sm:$0xff]
    %v110 = vld [vmem:[#allocation8 + $0x40] sm:$0xff]
    %v111 = vld [vmem:[#allocation8 + $0x48] sm:$0xff]
    %v112 = vld [vmem:[#allocation8 + $0x50] sm:$0xff]
    %v113 = vld [vmem:[#allocation8 + $0x58] sm:$0xff]
    %v114 = vld [vmem:[#allocation8 + $0x60] sm:$0xff]
    %v115 = vld [vmem:[#allocation8 + $0x68] sm:$0xff]
    %v116 = vld [vmem:[#allocation8 + $0x70] sm:$0xff]
    %v117 = vld [vmem:[#allocation8 + $0x78] sm:$0xff]
    %v118 = vld [vmem:[%s3] sm:$0x1]
    %v119 = vld [vmem:[#allocation9] sm:$0xff]
    %v120 = vld [vmem:[#allocation9 + $0x8] sm:$0xff]
    %v121 = vld [vmem:[#allocation9 + $0x10] sm:$0xff]
    %v122 = vld [vmem:[#allocation9 + $0x18] sm:$0xff]
    %v123 = vld [vmem:[#allocation9 + $0x20] sm:$0xff]
    %v124 = vld [vmem:[#allocation9 + $0x28] sm:$0xff]
    %v125 = vld [vmem:[#allocation9 + $0x30] sm:$0xff]
    %v126 = vld [vmem:[#allocation9 + $0x38] sm:$0xff]
    %v127 = vld [vmem:[#allocation9 + $0x40] sm:$0xff]
    %v128 = vld [vmem:[#allocation9 + $0x48] sm:$0xff]
    %v129 = vld [vmem:[#allocation9 + $0x50] sm:$0xff]
    %v130 = vld [vmem:[#allocation9 + $0x58] sm:$0xff]
    %v131 = vld [vmem:[#allocation9 + $0x60] sm:$0xff]
    %v132 = vld [vmem:[#allocation9 + $0x68] sm:$0xff]
    %v133 = vld [vmem:[#allocation9 + $0x70] sm:$0xff]
    %v134 = vld [vmem:[#allocation9 + $0x78] sm:$0xff]
    %v135 = vld [vmem:[#allocation9 + $0x80] sm:$0xff]
    %v136 = vld [vmem:[#allocation9 + $0x88] sm:$0xff]
    %v137 = vld [vmem:[#allocation9 + $0x90] sm:$0xff]
    %v138 = vld [vmem:[#allocation9 + $0x98] sm:$0xff]
    %v139 = vld [vmem:[#allocation9 + $0xa0] sm:$0xff]
    %v140 = vld [vmem:[#allocation9 + $0xa8] sm:$0xff]
    %v141 = vld [vmem:[#allocation9 + $0xb0] sm:$0xff]
    %v142 = vld [vmem:[#allocation9 + $0xb8] sm:$0xff]
    %v143 = vld [vmem:[#allocation9 + $0xc0] sm:$0xff]
    %v144 = vld [vmem:[#allocation9 + $0xc8] sm:$0xff]
    %v145 = vld [vmem:[#allocation9 + $0xd0] sm:$0xff]
    %v146 = vld [vmem:[#allocation9 + $0xd8] sm:$0xff]
    %v147 = vld [vmem:[#allocation9 + $0xe0] sm:$0xff]
    %v148 = vld [vmem:[#allocation9 + $0xe8] sm:$0xff]
    %v149 = vld [vmem:[#allocation9 + $0xf0] sm:$0xff]
    %v150 = vld [vmem:[#allocation9 + $0xf8] sm:$0xff]
    %v151 = vld [vmem:[%s5] sm:$0x1]
    %v153 = vlaneseq
    %v154 = vshrl.u32 %v153, 7
    %v155 = vsub.s32 0, %v154
    %v156 = vrot.slane %v151, %v155
    %v158 = vld [vmem:[#allocation11] sm:$0xff]
    %v159 = vld [vmem:[#allocation11 + $0x8] sm:$0xff]
    %v160 = vld [vmem:[#allocation11 + $0x10] sm:$0xff]
    %v161 = vld [vmem:[#allocation11 + $0x18] sm:$0xff]
    %v162 = vld [vmem:[#allocation11 + $0x20] sm:$0xff]
    %v163 = vld [vmem:[#allocation11 + $0x28] sm:$0xff]
    %v164 = vld [vmem:[#allocation11 + $0x30] sm:$0xff]
    %v165 = vld [vmem:[#allocation11 + $0x38] sm:$0xff]
    %v166 = vld [vmem:[#allocation11 + $0x40] sm:$0xff]
    %v167 = vld [vmem:[#allocation11 + $0x48] sm:$0xff]
    %v168 = vld [vmem:[#allocation11 + $0x50] sm:$0xff]
    %v169 = vld [vmem:[#allocation11 + $0x58] sm:$0xff]
    %v170 = vld [vmem:[#allocation11 + $0x60] sm:$0xff]
    %v171 = vld [vmem:[#allocation11 + $0x68] sm:$0xff]
    %v172 = vld [vmem:[#allocation11 + $0x70] sm:$0xff]
    %v173 = vld [vmem:[#allocation11 + $0x78] sm:$0xff]
    %v174 = vld [vmem:[%s7] sm:$0x1]
    %v175 = vld [vmem:[#allocation3] sm:$0xff]
    %v176 = vld [vmem:[#allocation3 + $0x8] sm:$0xff]
    %v177 = vld [vmem:[#allocation3 + $0x10] sm:$0xff]
    %v178 = vld [vmem:[#allocation3 + $0x18] sm:$0xff]
    %v179 = vld [vmem:[#allocation3 + $0x20] sm:$0xff]
    %v180 = vld [vmem:[#allocation3 + $0x28] sm:$0xff]
    %v181 = vld [vmem:[#allocation3 + $0x30] sm:$0xff]
    %v182 = vld [vmem:[#allocation3 + $0x38] sm:$0xff]
    %v184 = vlaneseq
    %v185 = vshrl.u32 %v184, 7
    %v186 = vsub.s32 0, %v185
    %v187 = vrot.slane %v118, %v186
    %vm189 = vcmask 261120
    %v191 = vsel %vm189, %v175, 0
    %v194 = vsel %vm189, %v176, 0
    %v197 = vsel %vm189, %v177, 0
    %v200 = vsel %vm189, %v178, 0
    %v203 = vsel %vm189, %v179, 0
    %v206 = vsel %vm189, %v180, 0
    %v209 = vsel %vm189, %v181, 0
    %v212 = vsel %vm189, %v182, 0
    %214 = vmatprep.subr.mxu0 0.0
    %215 = vmatpush1.msra.mxu0 %v98
    %216 = vmatprep.subr.mxu0 0.0
    %217 = vmatpush1.msra.mxu0 %v99
    %218 = vmatprep.subr.mxu0 0.0
    %219 = vmatpush1.msra.mxu0 %v100
    %220 = vmatprep.subr.mxu0 0.0
    %221 = vmatpush1.msra.mxu0 %v101
    %222 = vmatprep.subr.mxu0 0.0
    %223 = vmatpush1.msra.mxu0 0.0
    %224 = vmatprep.subr.mxu0 0.0
    %225 = vmatpush1.msra.mxu0 0.0
    %226 = vmatprep.subr.mxu0 0.0
    %227 = vmatpush1.msra.mxu0 0.0
    %228 = vmatprep.subr.mxu0 0.0
    %229 = vmatpush1.msra.mxu0 0.0
    %230 = vmatprep.subr.mxu0 0.0
    %231 = vmatpush1.msra.mxu0 0.0
    %232 = vmatprep.subr.mxu0 0.0
    %233 = vmatpush1.msra.mxu0 0.0
    %234 = vmatprep.subr.mxu0 0.0
    %235 = vmatpush1.msra.mxu0 0.0
    %236 = vmatprep.subr.mxu0 0.0
    %237 = vmatpush1.msra.mxu0 0.0
    %238 = vmatprep.subr.mxu0 0.0
    %239 = vmatpush1.msra.mxu0 0.0
    %240 = vmatprep.subr.mxu0 0.0
    %241 = vmatpush1.msra.mxu0 0.0
    %242 = vmatprep.subr.mxu0 0.0
    %243 = vmatpush1.msra.mxu0 0.0
    %244 = vmatprep.subr.mxu0 0.0
    %245 = vmatpush1.msra.mxu0 0.0
    %246 = vmatprep.subr.mxu0 0.0
    %247 = vmatpush1.msra.mxu0 0.0
    %248 = vmatprep.subr.mxu0 0.0
    %249 = vmatpush1.msra.mxu0 0.0
    %250 = vmatprep.subr.mxu0 0.0
    %251 = vmatpush1.msra.mxu0 0.0
    %252 = vmatprep.subr.mxu0 0.0
    %253 = vmatpush1.msra.mxu0 0.0
    %254 = vmatprep.subr.mxu0 0.0
    %255 = vmatpush1.msra.mxu0 0.0
    %256 = vmatprep.subr.mxu0 0.0
    %257 = vmatpush1.msra.mxu0 0.0
    %258 = vmatprep.subr.mxu0 0.0
    %259 = vmatpush1.msra.mxu0 0.0
    %260 = vmatprep.subr.mxu0 0.0
    %261 = vmatpush1.msra.mxu0 0.0
    %262 = vmatprep.subr.mxu0 0.0
    %263 = vmatpush1.msra.mxu0 0.0
    %264 = vmatprep.subr.mxu0 0.0
    %265 = vmatpush1.msra.mxu0 0.0
    %266 = vmatprep.subr.mxu0 0.0
    %267 = vmatpush1.msra.mxu0 0.0
    %268 = vmatprep.subr.mxu0 0.0
    %269 = vmatpush1.msra.mxu0 0.0
    %270 = vmatprep.subr.mxu0 0.0
    %271 = vmatpush1.msra.mxu0 0.0
    %272 = vmatprep.subr.mxu0 0.0
    %273 = vmatpush1.msra.mxu0 0.0
    %274 = vmatprep.subr.mxu0 0.0
    %275 = vmatpush1.msra.mxu0 0.0
    %276 = vmatprep.subr.mxu0 0.0
    %277 = vmatpush1.msra.mxu0 0.0
    %278 = vmatprep.mubr.f32.mxu0 0.0
    %279 = vmatmul.mubr.f32.gmra.mrb[0].mxu0 %v191
    %v280 = vpop.f32.mrb[0].mxu0
    %v281 = vadd.f32 %v187, %v280
    %v282 = vpop.f32.mrb[0].mxu0
    %283 = vmatprep.mubr.f32.mxu0 0.0
    %284 = vmatmul.mubr.f32.gmra.mrb[0].mxu0 %v194
    %v285 = vpop.f32.mrb[0].mxu0
    %v286 = vadd.f32 %v187, %v285
    %v287 = vpop.f32.mrb[0].mxu0
    %288 = vmatprep.mubr.f32.mxu0 0.0
    %289 = vmatmul.mubr.f32.gmra.mrb[0].mxu0 %v197
    %v290 = vpop.f32.mrb[0].mxu0
    %v291 = vadd.f32 %v187, %v290
    %v292 = vpop.f32.mrb[0].mxu0
    %293 = vmatprep.mubr.f32.mxu0 0.0
    %294 = vmatmul.mubr.f32.gmra.mrb[0].mxu0 %v200
    %v295 = vpop.f32.mrb[0].mxu0
    %v296 = vadd.f32 %v187, %v295
    %v297 = vpop.f32.mrb[0].mxu0
    %298 = vmatprep.mubr.f32.mxu0 0.0
    %299 = vmatmul.mubr.f32.gmra.mrb[0].mxu0 %v203
    %v300 = vpop.f32.mrb[0].mxu0
    %v301 = vadd.f32 %v187, %v300
    %v302 = vpop.f32.mrb[0].mxu0
    %303 = vmatprep.mubr.f32.mxu0 0.0
    %304 = vmatmul.mubr.f32.gmra.mrb[0].mxu0 %v206
    %v305 = vpop.f32.mrb[0].mxu0
    %v306 = vadd.f32 %v187, %v305
    %v307 = vpop.f32.mrb[0].mxu0
    %308 = vmatprep.mubr.f32.mxu0 0.0
    %309 = vmatmul.mubr.f32.gmra.mrb[0].mxu0 %v209
    %v310 = vpop.f32.mrb[0].mxu0
    %v311 = vadd.f32 %v187, %v310
    %v312 = vpop.f32.mrb[0].mxu0
    %313 = vmatprep.mubr.f32.mxu0 0.0
    %314 = vmatmul.mubr.f32.gmra.mrb[0].mxu0 %v212
    %v315 = vpop.f32.mrb[0].mxu0
    %v316 = vadd.f32 %v187, %v315
    %v317 = vpop.f32.mrb[0].mxu0
    %318 = vdwg.mxu0
    %319 = vst [vmem:[#allocation2] sm:$0xff] %v281
    %320 = vst [vmem:[#allocation2 + $0x8] sm:$0xff] %v286
    %321 = vst [vmem:[#allocation2 + $0x10] sm:$0xff] %v291
    %322 = vst [vmem:[#allocation2 + $0x18] sm:$0xff] %v296
    %323 = vst [vmem:[#allocation2 + $0x20] sm:$0xff] %v301
    %324 = vst [vmem:[#allocation2 + $0x28] sm:$0xff] %v306
    %325 = vst [vmem:[#allocation2 + $0x30] sm:$0xff] %v311
    %326 = vst [vmem:[#allocation2 + $0x38] sm:$0xff] %v316
    %v327 = vld [vmem:[#allocation2] sm:$0xff]
    %328 = vmatprep.subr.mxu0 0.0
    %329 = vmatpush1.msra.mxu0 %v102
    %330 = vmatprep.subr.mxu0 0.0
    %331 = vmatpush1.msra.mxu0 %v103
    %332 = vmatprep.subr.mxu0 0.0
    %333 = vmatpush1.msra.mxu0 %v104
    %334 = vmatprep.subr.mxu0 0.0
    %335 = vmatpush1.msra.mxu0 %v105
    %336 = vmatprep.subr.mxu0 0.0
    %337 = vmatpush1.msra.mxu0 %v106
    %338 = vmatprep.subr.mxu0 0.0
    %339 = vmatpush1.msra.mxu0 %v107
    %340 = vmatprep.subr.mxu0 0.0
    %341 = vmatpush1.msra.mxu0 %v108
    %342 = vmatprep.subr.mxu0 0.0
    %343 = vmatpush1.msra.mxu0 %v109
    %344 = vmatprep.subr.mxu0 0.0
    %345 = vmatpush1.msra.mxu0 %v110
    %346 = vmatprep.subr.mxu0 0.0
    %347 = vmatpush1.msra.mxu0 %v111
    %348 = vmatprep.subr.mxu0 0.0
    %349 = vmatpush1.msra.mxu0 %v112
    %350 = vmatprep.subr.mxu0 0.0
    %351 = vmatpush1.msra.mxu0 %v113
    %352 = vmatprep.subr.mxu0 0.0
    %353 = vmatpush1.msra.mxu0 %v114
    %354 = vmatprep.subr.mxu0 0.0
    %355 = vmatpush1.msra.mxu0 %v115
    %356 = vmatprep.subr.mxu0 0.0
    %357 = vmatpush1.msra.mxu0 %v116
    %358 = vmatprep.subr.mxu0 0.0
    %359 = vmatpush1.msra.mxu0 %v117
    %360 = vmatprep.subr.mxu0 0.0
    %361 = vmatpush1.msra.mxu0 0.0
    %362 = vmatprep.subr.mxu0 0.0
    %363 = vmatpush1.msra.mxu0 0.0
    %364 = vmatprep.subr.mxu0 0.0
    %365 = vmatpush1.msra.mxu0 0.0
    %366 = vmatprep.subr.mxu0 0.0
    %367 = vmatpush1.msra.mxu0 0.0
    %368 = vmatprep.subr.mxu0 0.0
    %369 = vmatpush1.msra.mxu0 0.0
    %370 = vmatprep.subr.mxu0 0.0
    %371 = vmatpush1.msra.mxu0 0.0
    %372 = vmatprep.subr.mxu0 0.0
    %373 = vmatpush1.msra.mxu0 0.0
    %374 = vmatprep.subr.mxu0 0.0
    %375 = vmatpush1.msra.mxu0 0.0
    %376 = vmatprep.subr.mxu0 0.0
    %377 = vmatpush1.msra.mxu0 0.0
    %378 = vmatprep.subr.mxu0 0.0
    %379 = vmatpush1.msra.mxu0 0.0
    %380 = vmatprep.subr.mxu0 0.0
    %381 = vmatpush1.msra.mxu0 0.0
    %382 = vmatprep.subr.mxu0 0.0
    %383 = vmatpush1.msra.mxu0 0.0
    %384 = vmatprep.subr.mxu0 0.0
    %385 = vmatpush1.msra.mxu0 0.0
    %386 = vmatprep.subr.mxu0 0.0
    %387 = vmatpush1.msra.mxu0 0.0
    %388 = vmatprep.subr.mxu0 0.0
    %389 = vmatpush1.msra.mxu0 0.0
    %390 = vmatprep.subr.mxu0 0.0
    %391 = vmatpush1.msra.mxu0 0.0
    %392 = vmatprep.mubr.f32.mxu0 0.0
    %393 = vmatmul.mubr.f32.gmra.mrb[0].mxu0 0.0
    %v394 = vpop.f32.mrb[0].mxu0
    %v395 = vadd.f32 0.0, %v394
    %v396 = vpop.f32.mrb[0].mxu0
    %397 = vdwg.mxu0
    %v398 = vadd.f32 %v327, %v395
    %v399 = vtanh.pop %v398
    %400 = vmatprep.subr.mxu0 0.0
    %401 = vmatpush1.msra.mxu0 %v119
    %402 = vmatprep.subr.mxu0 0.0
    %403 = vmatpush1.msra.mxu0 %v120
    %404 = vmatprep.subr.mxu0 0.0
    %405 = vmatpush1.msra.mxu0 %v121
    %406 = vmatprep.subr.mxu0 0.0
    %407 = vmatpush1.msra.mxu0 %v122
    %408 = vmatprep.subr.mxu0 0.0
    %409 = vmatpush1.msra.mxu0 %v123
    %410 = vmatprep.subr.mxu0 0.0
    %411 = vmatpush1.msra.mxu0 %v124
    %412 = vmatprep.subr.mxu0 0.0
    %413 = vmatpush1.msra.mxu0 %v125
    %414 = vmatprep.subr.mxu0 0.0
    %415 = vmatpush1.msra.mxu0 %v126
    %416 = vmatprep.subr.mxu0 0.0
    %417 = vmatpush1.msra.mxu0 %v127
    %418 = vmatprep.subr.mxu0 0.0
    %419 = vmatpush1.msra.mxu0 %v128
    %420 = vmatprep.subr.mxu0 0.0
    %421 = vmatpush1.msra.mxu0 %v129
    %422 = vmatprep.subr.mxu0 0.0
    %423 = vmatpush1.msra.mxu0 %v130
    %424 = vmatprep.subr.mxu0 0.0
    %425 = vmatpush1.msra.mxu0 %v131
    %426 = vmatprep.subr.mxu0 0.0
    %427 = vmatpush1.msra.mxu0 %v132
    %428 = vmatprep.subr.mxu0 0.0
    %429 = vmatpush1.msra.mxu0 %v133
    %430 = vmatprep.subr.mxu0 0.0
    %431 = vmatpush1.msra.mxu0 %v134
    %432 = vmatprep.subr.mxu0 0.0
    %433 = vmatpush1.msra.mxu0 %v135
    %434 = vmatprep.subr.mxu0 0.0
    %435 = vmatpush1.msra.mxu0 %v136
    %436 = vmatprep.subr.mxu0 0.0
    %437 = vmatpush1.msra.mxu0 %v137
    %438 = vmatprep.subr.mxu0 0.0
    %439 = vmatpush1.msra.mxu0 %v138
    %440 = vmatprep.subr.mxu0 0.0
    %441 = vmatpush1.msra.mxu0 %v139
    %442 = vmatprep.subr.mxu0 0.0
    %443 = vmatpush1.msra.mxu0 %v140
    %444 = vmatprep.subr.mxu0 0.0
    %445 = vmatpush1.msra.mxu0 %v141
    %446 = vmatprep.subr.mxu0 0.0
    %447 = vmatpush1.msra.mxu0 %v142
    %448 = vmatprep.subr.mxu0 0.0
    %449 = vmatpush1.msra.mxu0 %v143
    %450 = vmatprep.subr.mxu0 0.0
    %451 = vmatpush1.msra.mxu0 %v144
    %452 = vmatprep.subr.mxu0 0.0
    %453 = vmatpush1.msra.mxu0 %v145
    %454 = vmatprep.subr.mxu0 0.0
    %455 = vmatpush1.msra.mxu0 %v146
    %456 = vmatprep.subr.mxu0 0.0
    %457 = vmatpush1.msra.mxu0 %v147
    %458 = vmatprep.subr.mxu0 0.0
    %459 = vmatpush1.msra.mxu0 %v148
    %460 = vmatprep.subr.mxu0 0.0
    %461 = vmatpush1.msra.mxu0 %v149
    %462 = vmatprep.subr.mxu0 0.0
    %463 = vmatpush1.msra.mxu0 %v150
    %464 = vmatprep.mubr.f32.mxu0 0.0
    %465 = vmatmul.mubr.f32.gmra.mrb[0].mxu0 %v399
    %v466 = vpop.f32.mrb[0].mxu0
    %v467 = vadd.f32 %v156, %v466
    %v468 = vpop.f32.mrb[0].mxu0
    %469 = vdwg.mxu0
    %v470 = vtanh.pop %v467
    %471 = vst [vmem:[#allocation2] sm:$0xff] %v470
    %s472 = scalar_lea.vmem [#allocation2], 8
    %v473 = vld [vmem:[%s472] sm:$0xff]
    %474 = vmatprep.subr.mxu0 0.0
    %475 = vmatpush1.msra.mxu0 %v102
    %476 = vmatprep.subr.mxu0 0.0
    %477 = vmatpush1.msra.mxu0 %v103
    %478 = vmatprep.subr.mxu0 0.0
    %479 = vmatpush1.msra.mxu0 %v104
    %480 = vmatprep.subr.mxu0 0.0
    %481 = vmatpush1.msra.mxu0 %v105
    %482 = vmatprep.subr.mxu0 0.0
    %483 = vmatpush1.msra.mxu0 %v106
    %484 = vmatprep.subr.mxu0 0.0
    %485 = vmatpush1.msra.mxu0 %v107
    %486 = vmatprep.subr.mxu0 0.0
    %487 = vmatpush1.msra.mxu0 %v108
    %488 = vmatprep.subr.mxu0 0.0
    %489 = vmatpush1.msra.mxu0 %v109
    %490 = vmatprep.subr.mxu0 0.0
    %491 = vmatpush1.msra.mxu0 %v110
    %492 = vmatprep.subr.mxu0 0.0
    %493 = vmatpush1.msra.mxu0 %v111
    %494 = vmatprep.subr.mxu0 0.0
    %495 = vmatpush1.msra.mxu0 %v112
    %496 = vmatprep.subr.mxu0 0.0
    %497 = vmatpush1.msra.mxu0 %v113
    %498 = vmatprep.subr.mxu0 0.0
    %499 = vmatpush1.msra.mxu0 %v114
    %500 = vmatprep.subr.mxu0 0.0
    %501 = vmatpush1.msra.mxu0 %v115
    %502 = vmatprep.subr.mxu0 0.0
    %503 = vmatpush1.msra.mxu0 %v116
    %504 = vmatprep.subr.mxu0 0.0
    %505 = vmatpush1.msra.mxu0 %v117
    %506 = vmatprep.subr.mxu0 0.0
    %507 = vmatpush1.msra.mxu0 0.0
    %508 = vmatprep.subr.mxu0 0.0
    %509 = vmatpush1.msra.mxu0 0.0
    %510 = vmatprep.subr.mxu0 0.0
    %511 = vmatpush1.msra.mxu0 0.0
    %512 = vmatprep.subr.mxu0 0.0
    %513 = vmatpush1.msra.mxu0 0.0
    %514 = vmatprep.subr.mxu0 0.0
    %515 = vmatpush1.msra.mxu0 0.0
    %516 = vmatprep.subr.mxu0 0.0
    %517 = vmatpush1.msra.mxu0 0.0
    %518 = vmatprep.subr.mxu0 0.0
    %519 = vmatpush1.msra.mxu0 0.0
    %520 = vmatprep.subr.mxu0 0.0
    %521 = vmatpush1.msra.mxu0 0.0
    %522 = vmatprep.subr.mxu0 0.0
    %523 = vmatpush1.msra.mxu0 0.0
    %524 = vmatprep.subr.mxu0 0.0
    %525 = vmatpush1.msra.mxu0 0.0
    %526 = vmatprep.subr.mxu0 0.0
    %527 = vmatpush1.msra.mxu0 0.0
    %528 = vmatprep.subr.mxu0 0.0
    %529 = vmatpush1.msra.mxu0 0.0
    %530 = vmatprep.subr.mxu0 0.0
    %531 = vmatpush1.msra.mxu0 0.0
    %532 = vmatprep.subr.mxu0 0.0
    %533 = vmatpush1.msra.mxu0 0.0
    %534 = vmatprep.subr.mxu0 0.0
    %535 = vmatpush1.msra.mxu0 0.0
    %536 = vmatprep.subr.mxu0 0.0
    %537 = vmatpush1.msra.mxu0 0.0
    %538 = vmatprep.mubr.f32.mxu0 0.0
    %539 = vmatmul.mubr.f32.gmra.mrb[0].mxu0 %v399
    %v540 = vpop.f32.mrb[0].mxu0
    %v541 = vadd.f32 0.0, %v540
    %v542 = vpop.f32.mrb[0].mxu0
    %543 = vdwg.mxu0
    %v544 = vadd.f32 %v473, %v541
    %v545 = vtanh.pop %v544
    %546 = vmatprep.subr.mxu0 0.0
    %547 = vmatpush1.msra.mxu0 %v119
    %548 = vmatprep.subr.mxu0 0.0
    %549 = vmatpush1.msra.mxu0 %v120
    %550 = vmatprep.subr.mxu0 0.0
    %551 = vmatpush1.msra.mxu0 %v121
    %552 = vmatprep.subr.mxu0 0.0
    %553 = vmatpush1.msra.mxu0 %v122
    %554 = vmatprep.subr.mxu0 0.0
    %555 = vmatpush1.msra.mxu0 %v123
    %556 = vmatprep.subr.mxu0 0.0
    %557 = vmatpush1.msra.mxu0 %v124
    %558 = vmatprep.subr.mxu0 0.0
    %559 = vmatpush1.msra.mxu0 %v125
    %560 = vmatprep.subr.mxu0 0.0
    %561 = vmatpush1.msra.mxu0 %v126
    %562 = vmatprep.subr.mxu0 0.0
    %563 = vmatpush1.msra.mxu0 %v127
    %564 = vmatprep.subr.mxu0 0.0
    %565 = vmatpush1.msra.mxu0 %v128
    %566 = vmatprep.subr.mxu0 0.0
    %567 = vmatpush1.msra.mxu0 %v129
    %568 = vmatprep.subr.mxu0 0.0
    %569 = vmatpush1.msra.mxu0 %v130
    %570 = vmatprep.subr.mxu0 0.0
    %571 = vmatpush1.msra.mxu0 %v131
    %572 = vmatprep.subr.mxu0 0.0
    %573 = vmatpush1.msra.mxu0 %v132
    %574 = vmatprep.subr.mxu0 0.0
    %575 = vmatpush1.msra.mxu0 %v133
    %576 = vmatprep.subr.mxu0 0.0
    %577 = vmatpush1.msra.mxu0 %v134
    %578 = vmatprep.subr.mxu0 0.0
    %579 = vmatpush1.msra.mxu0 %v135
    %580 = vmatprep.subr.mxu0 0.0
    %581 = vmatpush1.msra.mxu0 %v136
    %582 = vmatprep.subr.mxu0 0.0
    %583 = vmatpush1.msra.mxu0 %v137
    %584 = vmatprep.subr.mxu0 0.0
    %585 = vmatpush1.msra.mxu0 %v138
    %586 = vmatprep.subr.mxu0 0.0
    %587 = vmatpush1.msra.mxu0 %v139
    %588 = vmatprep.subr.mxu0 0.0
    %589 = vmatpush1.msra.mxu0 %v140
    %590 = vmatprep.subr.mxu0 0.0
    %591 = vmatpush1.msra.mxu0 %v141
    %592 = vmatprep.subr.mxu0 0.0
    %593 = vmatpush1.msra.mxu0 %v142
    %594 = vmatprep.subr.mxu0 0.0
    %595 = vmatpush1.msra.mxu0 %v143
    %596 = vmatprep.subr.mxu0 0.0
    %597 = vmatpush1.msra.mxu0 %v144
    %598 = vmatprep.subr.mxu0 0.0
    %599 = vmatpush1.msra.mxu0 %v145
    %600 = vmatprep.subr.mxu0 0.0
    %601 = vmatpush1.msra.mxu0 %v146
    %602 = vmatprep.subr.mxu0 0.0
    %603 = vmatpush1.msra.mxu0 %v147
    %604 = vmatprep.subr.mxu0 0.0
    %605 = vmatpush1.msra.mxu0 %v148
    %606 = vmatprep.subr.mxu0 0.0
    %607 = vmatpush1.msra.mxu0 %v149
    %608 = vmatprep.subr.mxu0 0.0
    %609 = vmatpush1.msra.mxu0 %v150
    %610 = vmatprep.mubr.f32.mxu0 %v470
    %611 = vmatmul.mubr.f32.gmra.mrb[0].mxu0 %v545
    %v612 = vpop.f32.mrb[0].mxu0
    %v613 = vadd.f32 %v156, %v612
    %v614 = vpop.f32.mrb[0].mxu0
    %615 = vdwg.mxu0
    %v616 = vtanh.pop %v613
    %617 = vst [vmem:[%s472] sm:$0xff] %v616
    %s618 = scalar_lea.vmem [#allocation2], 16
    %v619 = vld [vmem:[%s618] sm:$0xff]
    %620 = vmatprep.subr.mxu0 0.0
    %621 = vmatpush1.msra.mxu0 %v102
    %622 = vmatprep.subr.mxu0 0.0
    %623 = vmatpush1.msra.mxu0 %v103
    %624 = vmatprep.subr.mxu0 0.0
    %625 = vmatpush1.msra.mxu0 %v104
    %626 = vmatprep.subr.mxu0 0.0
    %627 = vmatpush1.msra.mxu0 %v105
    %628 = vmatprep.subr.mxu0 0.0
    %629 = vmatpush1.msra.mxu0 %v106
    %630 = vmatprep.subr.mxu0 0.0
    %631 = vmatpush1.msra.mxu0 %v107
    %632 = vmatprep.subr.mxu0 0.0
    %633 = vmatpush1.msra.mxu0 %v108
    %634 = vmatprep.subr.mxu0 0.0
    %635 = vmatpush1.msra.mxu0 %v109
    %636 = vmatprep.subr.mxu0 0.0
    %637 = vmatpush1.msra.mxu0 %v110
    %638 = vmatprep.subr.mxu0 0.0
    %639 = vmatpush1.msra.mxu0 %v111
    %640 = vmatprep.subr.mxu0 0.0
    %641 = vmatpush1.msra.mxu0 %v112
    %642 = vmatprep.subr.mxu0 0.0
    %643 = vmatpush1.msra.mxu0 %v113
    %644 = vmatprep.subr.mxu0 0.0
    %645 = vmatpush1.msra.mxu0 %v114
    %646 = vmatprep.subr.mxu0 0.0
    %647 = vmatpush1.msra.mxu0 %v115
    %648 = vmatprep.subr.mxu0 0.0
    %649 = vmatpush1.msra.mxu0 %v116
    %650 = vmatprep.subr.mxu0 0.0
    %651 = vmatpush1.msra.mxu0 %v117
    %652 = vmatprep.subr.mxu0 0.0
    %653 = vmatpush1.msra.mxu0 0.0
    %654 = vmatprep.subr.mxu0 0.0
    %655 = vmatpush1.msra.mxu0 0.0
    %656 = vmatprep.subr.mxu0 0.0
    %657 = vmatpush1.msra.mxu0 0.0
    %658 = vmatprep.subr.mxu0 0.0
    %659 = vmatpush1.msra.mxu0 0.0
    %660 = vmatprep.subr.mxu0 0.0
    %661 = vmatpush1.msra.mxu0 0.0
    %662 = vmatprep.subr.mxu0 0.0
    %663 = vmatpush1.msra.mxu0 0.0
    %664 = vmatprep.subr.mxu0 0.0
    %665 = vmatpush1.msra.mxu0 0.0
    %666 = vmatprep.subr.mxu0 0.0
    %667 = vmatpush1.msra.mxu0 0.0
    %668 = vmatprep.subr.mxu0 0.0
    %669 = vmatpush1.msra.mxu0 0.0
    %670 = vmatprep.subr.mxu0 0.0
    %671 = vmatpush1.msra.mxu0 0.0
    %672 = vmatprep.subr.mxu0 0.0
    %673 = vmatpush1.msra.mxu0 0.0
    %674 = vmatprep.subr.mxu0 0.0
    %675 = vmatpush1.msra.mxu0 0.0
    %676 = vmatprep.subr.mxu0 0.0
    %677 = vmatpush1.msra.mxu0 0.0
    %678 = vmatprep.subr.mxu0 0.0
    %679 = vmatpush1.msra.mxu0 0.0
    %680 = vmatprep.subr.mxu0 0.0
    %681 = vmatpush1.msra.mxu0 0.0
    %682 = vmatprep.subr.mxu0 0.0
    %683 = vmatpush1.msra.mxu0 0.0
    %684 = vmatprep.mubr.f32.mxu0 0.0
    %685 = vmatmul.mubr.f32.gmra.mrb[0].mxu0 %v545
    %v686 = vpop.f32.mrb[0].mxu0
    %v687 = vadd.f32 0.0, %v686
    %v688 = vpop.f32.mrb[0].mxu0
    %689 = vdwg.mxu0
    %v690 = vadd.f32 %v619, %v687
    %v691 = vtanh.pop %v690
    %692 = vmatprep.subr.mxu0 0.0
    %693 = vmatpush1.msra.mxu0 %v119
    %694 = vmatprep.subr.mxu0 0.0
    %695 = vmatpush1.msra.mxu0 %v120
    %696 = vmatprep.subr.mxu0 0.0
    %697 = vmatpush1.msra.mxu0 %v121
    %698 = vmatprep.subr.mxu0 0.0
    %699 = vmatpush1.msra.mxu0 %v122
    %700 = vmatprep.subr.mxu0 0.0
    %701 = vmatpush1.msra.mxu0 %v123
    %702 = vmatprep.subr.mxu0 0.0
    %703 = vmatpush1.msra.mxu0 %v124
    %704 = vmatprep.subr.mxu0 0.0
    %705 = vmatpush1.msra.mxu0 %v125
    %706 = vmatprep.subr.mxu0 0.0
    %707 = vmatpush1.msra.mxu0 %v126
    %708 = vmatprep.subr.mxu0 0.0
    %709 = vmatpush1.msra.mxu0 %v127
    %710 = vmatprep.subr.mxu0 0.0
    %711 = vmatpush1.msra.mxu0 %v128
    %712 = vmatprep.subr.mxu0 0.0
    %713 = vmatpush1.msra.mxu0 %v129
    %714 = vmatprep.subr.mxu0 0.0
    %715 = vmatpush1.msra.mxu0 %v130
    %716 = vmatprep.subr.mxu0 0.0
    %717 = vmatpush1.msra.mxu0 %v131
    %718 = vmatprep.subr.mxu0 0.0
    %719 = vmatpush1.msra.mxu0 %v132
    %720 = vmatprep.subr.mxu0 0.0
    %721 = vmatpush1.msra.mxu0 %v133
    %722 = vmatprep.subr.mxu0 0.0
    %723 = vmatpush1.msra.mxu0 %v134
    %724 = vmatprep.subr.mxu0 0.0
    %725 = vmatpush1.msra.mxu0 %v135
    %726 = vmatprep.subr.mxu0 0.0
    %727 = vmatpush1.msra.mxu0 %v136
    %728 = vmatprep.subr.mxu0 0.0
    %729 = vmatpush1.msra.mxu0 %v137
    %730 = vmatprep.subr.mxu0 0.0
    %731 = vmatpush1.msra.mxu0 %v138
    %732 = vmatprep.subr.mxu0 0.0
    %733 = vmatpush1.msra.mxu0 %v139
    %734 = vmatprep.subr.mxu0 0.0
    %735 = vmatpush1.msra.mxu0 %v140
    %736 = vmatprep.subr.mxu0 0.0
    %737 = vmatpush1.msra.mxu0 %v141
    %738 = vmatprep.subr.mxu0 0.0
    %739 = vmatpush1.msra.mxu0 %v142
    %740 = vmatprep.subr.mxu0 0.0
    %741 = vmatpush1.msra.mxu0 %v143
    %742 = vmatprep.subr.mxu0 0.0
    %743 = vmatpush1.msra.mxu0 %v144
    %744 = vmatprep.subr.mxu0 0.0
    %745 = vmatpush1.msra.mxu0 %v145
    %746 = vmatprep.subr.mxu0 0.0
    %747 = vmatpush1.msra.mxu0 %v146
    %748 = vmatprep.subr.mxu0 0.0
    %749 = vmatpush1.msra.mxu0 %v147
    %750 = vmatprep.subr.mxu0 0.0
    %751 = vmatpush1.msra.mxu0 %v148
    %752 = vmatprep.subr.mxu0 0.0
    %753 = vmatpush1.msra.mxu0 %v149
    %754 = vmatprep.subr.mxu0 0.0
    %755 = vmatpush1.msra.mxu0 %v150
    %756 = vmatprep.mubr.f32.mxu0 %v616
    %757 = vmatmul.mubr.f32.gmra.mrb[0].mxu0 %v691
    %v758 = vpop.f32.mrb[0].mxu0
    %v759 = vadd.f32 %v156, %v758
    %v760 = vpop.f32.mrb[0].mxu0
    %761 = vdwg.mxu0
    %v762 = vtanh.pop %v759
    %763 = vst [vmem:[%s618] sm:$0xff] %v762
    %s764 = scalar_lea.vmem [#allocation2], 24
    %v765 = vld [vmem:[%s764] sm:$0xff]
    %766 = vmatprep.subr.mxu0 0.0
    %767 = vmatpush1.msra.mxu0 %v102
    %768 = vmatprep.subr.mxu0 0.0
    %769 = vmatpush1.msra.mxu0 %v103
    %770 = vmatprep.subr.mxu0 0.0
    %771 = vmatpush1.msra.mxu0 %v104
    %772 = vmatprep.subr.mxu0 0.0
    %773 = vmatpush1.msra.mxu0 %v105
    %774 = vmatprep.subr.mxu0 0.0
    %775 = vmatpush1.msra.mxu0 %v106
    %776 = vmatprep.subr.mxu0 0.0
    %777 = vmatpush1.msra.mxu0 %v107
    %778 = vmatprep.subr.mxu0 0.0
    %779 = vmatpush1.msra.mxu0 %v108
    %780 = vmatprep.subr.mxu0 0.0
    %781 = vmatpush1.msra.mxu0 %v109
    %782 = vmatprep.subr.mxu0 0.0
    %783 = vmatpush1.msra.mxu0 %v110
    %784 = vmatprep.subr.mxu0 0.0
    %785 = vmatpush1.msra.mxu0 %v111
    %786 = vmatprep.subr.mxu0 0.0
    %787 = vmatpush1.msra.mxu0 %v112
    %788 = vmatprep.subr.mxu0 0.0
    %789 = vmatpush1.msra.mxu0 %v113
    %790 = vmatprep.subr.mxu0 0.0
    %791 = vmatpush1.msra.mxu0 %v114
    %792 = vmatprep.subr.mxu0 0.0
    %793 = vmatpush1.msra.mxu0 %v115
    %794 = vmatprep.subr.mxu0 0.0
    %795 = vmatpush1.msra.mxu0 %v116
    %796 = vmatprep.subr.mxu0 0.0
    %797 = vmatpush1.msra.mxu0 %v117
    %798 = vmatprep.subr.mxu0 0.0
    %799 = vmatpush1.msra.mxu0 0.0
    %800 = vmatprep.subr.mxu0 0.0
    %801 = vmatpush1.msra.mxu0 0.0
    %802 = vmatprep.subr.mxu0 0.0
    %803 = vmatpush1.msra.mxu0 0.0
    %804 = vmatprep.subr.mxu0 0.0
    %805 = vmatpush1.msra.mxu0 0.0
    %806 = vmatprep.subr.mxu0 0.0
    %807 = vmatpush1.msra.mxu0 0.0
    %808 = vmatprep.subr.mxu0 0.0
    %809 = vmatpush1.msra.mxu0 0.0
    %810 = vmatprep.subr.mxu0 0.0
    %811 = vmatpush1.msra.mxu0 0.0
    %812 = vmatprep.subr.mxu0 0.0
    %813 = vmatpush1.msra.mxu0 0.0
    %814 = vmatprep.subr.mxu0 0.0
    %815 = vmatpush1.msra.mxu0 0.0
    %816 = vmatprep.subr.mxu0 0.0
    %817 = vmatpush1.msra.mxu0 0.0
    %818 = vmatprep.subr.mxu0 0.0
    %819 = vmatpush1.msra.mxu0 0.0
    %820 = vmatprep.subr.mxu0 0.0
    %821 = vmatpush1.msra.mxu0 0.0
    %822 = vmatprep.subr.mxu0 0.0
    %823 = vmatpush1.msra.mxu0 0.0
    %824 = vmatprep.subr.mxu0 0.0
    %825 = vmatpush1.msra.mxu0 0.0
    %826 = vmatprep.subr.mxu0 0.0
    %827 = vmatpush1.msra.mxu0 0.0
    %828 = vmatprep.subr.mxu0 0.0
    %829 = vmatpush1.msra.mxu0 0.0
    %830 = vmatprep.mubr.f32.mxu0 0.0
    %831 = vmatmul.mubr.f32.gmra.mrb[0].mxu0 %v691
    %v832 = vpop.f32.mrb[0].mxu0
    %v833 = vadd.f32 0.0, %v832
    %v834 = vpop.f32.mrb[0].mxu0
    %835 = vdwg.mxu0
    %v836 = vadd.f32 %v765, %v833
    %v837 = vtanh.pop %v836
    %838 = vmatprep.subr.mxu0 0.0
    %839 = vmatpush1.msra.mxu0 %v119
    %840 = vmatprep.subr.mxu0 0.0
    %841 = vmatpush1.msra.mxu0 %v120
    %842 = vmatprep.subr.mxu0 0.0
    %843 = vmatpush1.msra.mxu0 %v121
    %844 = vmatprep.subr.mxu0 0.0
    %845 = vmatpush1.msra.mxu0 %v122
    %846 = vmatprep.subr.mxu0 0.0
    %847 = vmatpush1.msra.mxu0 %v123
    %848 = vmatprep.subr.mxu0 0.0
    %849 = vmatpush1.msra.mxu0 %v124
    %850 = vmatprep.subr.mxu0 0.0
    %851 = vmatpush1.msra.mxu0 %v125
    %852 = vmatprep.subr.mxu0 0.0
    %853 = vmatpush1.msra.mxu0 %v126
    %854 = vmatprep.subr.mxu0 0.0
    %855 = vmatpush1.msra.mxu0 %v127
    %856 = vmatprep.subr.mxu0 0.0
    %857 = vmatpush1.msra.mxu0 %v128
    %858 = vmatprep.subr.mxu0 0.0
    %859 = vmatpush1.msra.mxu0 %v129
    %860 = vmatprep.subr.mxu0 0.0
    %861 = vmatpush1.msra.mxu0 %v130
    %862 = vmatprep.subr.mxu0 0.0
    %863 = vmatpush1.msra.mxu0 %v131
    %864 = vmatprep.subr.mxu0 0.0
    %865 = vmatpush1.msra.mxu0 %v132
    %866 = vmatprep.subr.mxu0 0.0
    %867 = vmatpush1.msra.mxu0 %v133
    %868 = vmatprep.subr.mxu0 0.0
    %869 = vmatpush1.msra.mxu0 %v134
    %870 = vmatprep.subr.mxu0 0.0
    %871 = vmatpush1.msra.mxu0 %v135
    %872 = vmatprep.subr.mxu0 0.0
    %873 = vmatpush1.msra.mxu0 %v136
    %874 = vmatprep.subr.mxu0 0.0
    %875 = vmatpush1.msra.mxu0 %v137
    %876 = vmatprep.subr.mxu0 0.0
    %877 = vmatpush1.msra.mxu0 %v138
    %878 = vmatprep.subr.mxu0 0.0
    %879 = vmatpush1.msra.mxu0 %v139
    %880 = vmatprep.subr.mxu0 0.0
    %881 = vmatpush1.msra.mxu0 %v140
    %882 = vmatprep.subr.mxu0 0.0
    %883 = vmatpush1.msra.mxu0 %v141
    %884 = vmatprep.subr.mxu0 0.0
    %885 = vmatpush1.msra.mxu0 %v142
    %886 = vmatprep.subr.mxu0 0.0
    %887 = vmatpush1.msra.mxu0 %v143
    %888 = vmatprep.subr.mxu0 0.0
    %889 = vmatpush1.msra.mxu0 %v144
    %890 = vmatprep.subr.mxu0 0.0
    %891 = vmatpush1.msra.mxu0 %v145
    %892 = vmatprep.subr.mxu0 0.0
    %893 = vmatpush1.msra.mxu0 %v146
    %894 = vmatprep.subr.mxu0 0.0
    %895 = vmatpush1.msra.mxu0 %v147
    %896 = vmatprep.subr.mxu0 0.0
    %897 = vmatpush1.msra.mxu0 %v148
    %898 = vmatprep.subr.mxu0 0.0
    %899 = vmatpush1.msra.mxu0 %v149
    %900 = vmatprep.subr.mxu0 0.0
    %901 = vmatpush1.msra.mxu0 %v150
    %902 = vmatprep.mubr.f32.mxu0 %v762
    %903 = vmatmul.mubr.f32.gmra.mrb[0].mxu0 %v837
    %v904 = vpop.f32.mrb[0].mxu0
    %v905 = vadd.f32 %v156, %v904
    %v906 = vpop.f32.mrb[0].mxu0
    %907 = vdwg.mxu0
    %v908 = vtanh.pop %v905
    %909 = vst [vmem:[%s764] sm:$0xff] %v908
    %s910 = scalar_lea.vmem [#allocation2], 32
    %v911 = vld [vmem:[%s910] sm:$0xff]
    %912 = vmatprep.subr.mxu0 0.0
    %913 = vmatpush1.msra.mxu0 %v102
    %914 = vmatprep.subr.mxu0 0.0
    %915 = vmatpush1.msra.mxu0 %v103
    %916 = vmatprep.subr.mxu0 0.0
    %917 = vmatpush1.msra.mxu0 %v104
    %918 = vmatprep.subr.mxu0 0.0
    %919 = vmatpush1.msra.mxu0 %v105
    %920 = vmatprep.subr.mxu0 0.0
    %921 = vmatpush1.msra.mxu0 %v106
    %922 = vmatprep.subr.mxu0 0.0
    %923 = vmatpush1.msra.mxu0 %v107
    %924 = vmatprep.subr.mxu0 0.0
    %925 = vmatpush1.msra.mxu0 %v108
    %926 = vmatprep.subr.mxu0 0.0
    %927 = vmatpush1.msra.mxu0 %v109
    %928 = vmatprep.subr.mxu0 0.0
    %929 = vmatpush1.msra.mxu0 %v110
    %930 = vmatprep.subr.mxu0 0.0
    %931 = vmatpush1.msra.mxu0 %v111
    %932 = vmatprep.subr.mxu0 0.0
    %933 = vmatpush1.msra.mxu0 %v112
    %934 = vmatprep.subr.mxu0 0.0
    %935 = vmatpush1.msra.mxu0 %v113
    %936 = vmatprep.subr.mxu0 0.0
    %937 = vmatpush1.msra.mxu0 %v114
    %938 = vmatprep.subr.mxu0 0.0
    %939 = vmatpush1.msra.mxu0 %v115
    %940 = vmatprep.subr.mxu0 0.0
    %941 = vmatpush1.msra.mxu0 %v116
    %942 = vmatprep.subr.mxu0 0.0
    %943 = vmatpush1.msra.mxu0 %v117
    %944 = vmatprep.subr.mxu0 0.0
    %945 = vmatpush1.msra.mxu0 0.0
    %946 = vmatprep.subr.mxu0 0.0
    %947 = vmatpush1.msra.mxu0 0.0
    %948 = vmatprep.subr.mxu0 0.0
    %949 = vmatpush1.msra.mxu0 0.0
    %950 = vmatprep.subr.mxu0 0.0
    %951 = vmatpush1.msra.mxu0 0.0
    %952 = vmatprep.subr.mxu0 0.0
    %953 = vmatpush1.msra.mxu0 0.0
    %954 = vmatprep.subr.mxu0 0.0
    %955 = vmatpush1.msra.mxu0 0.0
    %956 = vmatprep.subr.mxu0 0.0
    %957 = vmatpush1.msra.mxu0 0.0
    %958 = vmatprep.subr.mxu0 0.0
    %959 = vmatpush1.msra.mxu0 0.0
    %960 = vmatprep.subr.mxu0 0.0
    %961 = vmatpush1.msra.mxu0 0.0
    %962 = vmatprep.subr.mxu0 0.0
    %963 = vmatpush1.msra.mxu0 0.0
    %964 = vmatprep.subr.mxu0 0.0
    %965 = vmatpush1.msra.mxu0 0.0
    %966 = vmatprep.subr.mxu0 0.0
    %967 = vmatpush1.msra.mxu0 0.0
    %968 = vmatprep.subr.mxu0 0.0
    %969 = vmatpush1.msra.mxu0 0.0
    %970 = vmatprep.subr.mxu0 0.0
    %971 = vmatpush1.msra.mxu0 0.0
    %972 = vmatprep.subr.mxu0 0.0
    %973 = vmatpush1.msra.mxu0 0.0
    %974 = vmatprep.subr.mxu0 0.0
    %975 = vmatpush1.msra.mxu0 0.0
    %976 = vmatprep.mubr.f32.mxu0 0.0
    %977 = vmatmul.mubr.f32.gmra.mrb[0].mxu0 %v837
    %v978 = vpop.f32.mrb[0].mxu0
    %v979 = vadd.f32 0.0, %v978
    %v980 = vpop.f32.mrb[0].mxu0
    %981 = vdwg.mxu0
    %v982 = vadd.f32 %v911, %v979
    %v983 = vtanh.pop %v982
    %984 = vmatprep.subr.mxu0 0.0
    %985 = vmatpush1.msra.mxu0 %v119
    %986 = vmatprep.subr.mxu0 0.0
    %987 = vmatpush1.msra.mxu0 %v120
    %988 = vmatprep.subr.mxu0 0.0
    %989 = vmatpush1.msra.mxu0 %v121
    %990 = vmatprep.subr.mxu0 0.0
    %991 = vmatpush1.msra.mxu0 %v122
    %992 = vmatprep.subr.mxu0 0.0
    %993 = vmatpush1.msra.mxu0 %v123
    %994 = vmatprep.subr.mxu0 0.0
    %995 = vmatpush1.msra.mxu0 %v124
    %996 = vmatprep.subr.mxu0 0.0
    %997 = vmatpush1.msra.mxu0 %v125
    %998 = vmatprep.subr.mxu0 0.0
    %999 = vmatpush1.msra.mxu0 %v126
    %1000 = vmatprep.subr.mxu0 0.0
    %1001 = vmatpush1.msra.mxu0 %v127
    %1002 = vmatprep.subr.mxu0 0.0
    %1003 = vmatpush1.msra.mxu0 %v128
    %1004 = vmatprep.subr.mxu0 0.0
    %1005 = vmatpush1.msra.mxu0 %v129
    %1006 = vmatprep.subr.mxu0 0.0
    %1007 = vmatpush1.msra.mxu0 %v130
    %1008 = vmatprep.subr.mxu0 0.0
    %1009 = vmatpush1.msra.mxu0 %v131
    %1010 = vmatprep.subr.mxu0 0.0
    %1011 = vmatpush1.msra.mxu0 %v132
    %1012 = vmatprep.subr.mxu0 0.0
    %1013 = vmatpush1.msra.mxu0 %v133
    %1014 = vmatprep.subr.mxu0 0.0
    %1015 = vmatpush1.msra.mxu0 %v134
    %1016 = vmatprep.subr.mxu0 0.0
    %1017 = vmatpush1.msra.mxu0 %v135
    %1018 = vmatprep.subr.mxu0 0.0
    %1019 = vmatpush1.msra.mxu0 %v136
    %1020 = vmatprep.subr.mxu0 0.0
    %1021 = vmatpush1.msra.mxu0 %v137
    %1022 = vmatprep.subr.mxu0 0.0
    %1023 = vmatpush1.msra.mxu0 %v138
    %1024 = vmatprep.subr.mxu0 0.0
    %1025 = vmatpush1.msra.mxu0 %v139
    %1026 = vmatprep.subr.mxu0 0.0
    %1027 = vmatpush1.msra.mxu0 %v140
    %1028 = vmatprep.subr.mxu0 0.0
    %1029 = vmatpush1.msra.mxu0 %v141
    %1030 = vmatprep.subr.mxu0 0.0
    %1031 = vmatpush1.msra.mxu0 %v142
    %1032 = vmatprep.subr.mxu0 0.0
    %1033 = vmatpush1.msra.mxu0 %v143
    %1034 = vmatprep.subr.mxu0 0.0
    %1035 = vmatpush1.msra.mxu0 %v144
    %1036 = vmatprep.subr.mxu0 0.0
    %1037 = vmatpush1.msra.mxu0 %v145
    %1038 = vmatprep.subr.mxu0 0.0
    %1039 = vmatpush1.msra.mxu0 %v146
    %1040 = vmatprep.subr.mxu0 0.0
    %1041 = vmatpush1.msra.mxu0 %v147
    %1042 = vmatprep.subr.mxu0 0.0
    %1043 = vmatpush1.msra.mxu0 %v148
    %1044 = vmatprep.subr.mxu0 0.0
    %1045 = vmatpush1.msra.mxu0 %v149
    %1046 = vmatprep.subr.mxu0 0.0
    %1047 = vmatpush1.msra.mxu0 %v150
    %1048 = vmatprep.mubr.f32.mxu0 %v908
    %1049 = vmatmul.mubr.f32.gmra.mrb[0].mxu0 %v983
    %v1050 = vpop.f32.mrb[0].mxu0
    %v1051 = vadd.f32 %v156, %v1050
    %v1052 = vpop.f32.mrb[0].mxu0
    %1053 = vdwg.mxu0
    %v1054 = vtanh.pop %v1051
    %1055 = vst [vmem:[%s910] sm:$0xff] %v1054
    %s1056 = scalar_lea.vmem [#allocation2], 40
    %v1057 = vld [vmem:[%s1056] sm:$0xff]
    %1058 = vmatprep.subr.mxu0 0.0
    %1059 = vmatpush1.msra.mxu0 %v102
    %1060 = vmatprep.subr.mxu0 0.0
    %1061 = vmatpush1.msra.mxu0 %v103
    %1062 = vmatprep.subr.mxu0 0.0
    %1063 = vmatpush1.msra.mxu0 %v104
    %1064 = vmatprep.subr.mxu0 0.0
    %1065 = vmatpush1.msra.mxu0 %v105
    %1066 = vmatprep.subr.mxu0 0.0
    %1067 = vmatpush1.msra.mxu0 %v106
    %1068 = vmatprep.subr.mxu0 0.0
    %1069 = vmatpush1.msra.mxu0 %v107
    %1070 = vmatprep.subr.mxu0 0.0
    %1071 = vmatpush1.msra.mxu0 %v108
    %1072 = vmatprep.subr.mxu0 0.0
    %1073 = vmatpush1.msra.mxu0 %v109
    %1074 = vmatprep.subr.mxu0 0.0
    %1075 = vmatpush1.msra.mxu0 %v110
    %1076 = vmatprep.subr.mxu0 0.0
    %1077 = vmatpush1.msra.mxu0 %v111
    %1078 = vmatprep.subr.mxu0 0.0
    %1079 = vmatpush1.msra.mxu0 %v112
    %1080 = vmatprep.subr.mxu0 0.0
    %1081 = vmatpush1.msra.mxu0 %v113
    %1082 = vmatprep.subr.mxu0 0.0
    %1083 = vmatpush1.msra.mxu0 %v114
    %1084 = vmatprep.subr.mxu0 0.0
    %1085 = vmatpush1.msra.mxu0 %v115
    %1086 = vmatprep.subr.mxu0 0.0
    %1087 = vmatpush1.msra.mxu0 %v116
    %1088 = vmatprep.subr.mxu0 0.0
    %1089 = vmatpush1.msra.mxu0 %v117
    %1090 = vmatprep.subr.mxu0 0.0
    %1091 = vmatpush1.msra.mxu0 0.0
    %1092 = vmatprep.subr.mxu0 0.0
    %1093 = vmatpush1.msra.mxu0 0.0
    %1094 = vmatprep.subr.mxu0 0.0
    %1095 = vmatpush1.msra.mxu0 0.0
    %1096 = vmatprep.subr.mxu0 0.0
    %1097 = vmatpush1.msra.mxu0 0.0
    %1098 = vmatprep.subr.mxu0 0.0
    %1099 = vmatpush1.msra.mxu0 0.0
    %1100 = vmatprep.subr.mxu0 0.0
    %1101 = vmatpush1.msra.mxu0 0.0
    %1102 = vmatprep.subr.mxu0 0.0
    %1103 = vmatpush1.msra.mxu0 0.0
    %1104 = vmatprep.subr.mxu0 0.0
    %1105 = vmatpush1.msra.mxu0 0.0
    %1106 = vmatprep.subr.mxu0 0.0
    %1107 = vmatpush1.msra.mxu0 0.0
    %1108 = vmatprep.subr.mxu0 0.0
    %1109 = vmatpush1.msra.mxu0 0.0
    %1110 = vmatprep.subr.mxu0 0.0
    %1111 = vmatpush1.msra.mxu0 0.0
    %1112 = vmatprep.subr.mxu0 0.0
    %1113 = vmatpush1.msra.mxu0 0.0
    %1114 = vmatprep.subr.mxu0 0.0
    %1115 = vmatpush1.msra.mxu0 0.0
    %1116 = vmatprep.subr.mxu0 0.0
    %1117 = vmatpush1.msra.mxu0 0.0
    %1118 = vmatprep.subr.mxu0 0.0
    %1119 = vmatpush1.msra.mxu0 0.0
    %1120 = vmatprep.subr.mxu0 0.0
    %1121 = vmatpush1.msra.mxu0 0.0
    %1122 = vmatprep.mubr.f32.mxu0 0.0
    %1123 = vmatmul.mubr.f32.gmra.mrb[0].mxu0 %v983
    %v1124 = vpop.f32.mrb[0].mxu0
    %v1125 = vadd.f32 0.0, %v1124
    %v1126 = vpop.f32.mrb[0].mxu0
    %1127 = vdwg.mxu0
    %v1128 = vadd.f32 %v1057, %v1125
    %v1129 = vtanh.pop %v1128
    %1130 = vmatprep.subr.mxu0 0.0
    %1131 = vmatpush1.msra.mxu0 %v119
    %1132 = vmatprep.subr.mxu0 0.0
    %1133 = vmatpush1.msra.mxu0 %v120
    %1134 = vmatprep.subr.mxu0 0.0
    %1135 = vmatpush1.msra.mxu0 %v121
    %1136 = vmatprep.subr.mxu0 0.0
    %1137 = vmatpush1.msra.mxu0 %v122
    %1138 = vmatprep.subr.mxu0 0.0
    %1139 = vmatpush1.msra.mxu0 %v123
    %1140 = vmatprep.subr.mxu0 0.0
    %1141 = vmatpush1.msra.mxu0 %v124
    %1142 = vmatprep.subr.mxu0 0.0
    %1143 = vmatpush1.msra.mxu0 %v125
    %1144 = vmatprep.subr.mxu0 0.0
    %1145 = vmatpush1.msra.mxu0 %v126
    %1146 = vmatprep.subr.mxu0 0.0
    %1147 = vmatpush1.msra.mxu0 %v127
    %1148 = vmatprep.subr.mxu0 0.0
    %1149 = vmatpush1.msra.mxu0 %v128
    %1150 = vmatprep.subr.mxu0 0.0
    %1151 = vmatpush1.msra.mxu0 %v129
    %1152 = vmatprep.subr.mxu0 0.0
    %1153 = vmatpush1.msra.mxu0 %v130
    %1154 = vmatprep.subr.mxu0 0.0
    %1155 = vmatpush1.msra.mxu0 %v131
    %1156 = vmatprep.subr.mxu0 0.0
    %1157 = vmatpush1.msra.mxu0 %v132
    %1158 = vmatprep.subr.mxu0 0.0
    %1159 = vmatpush1.msra.mxu0 %v133
    %1160 = vmatprep.subr.mxu0 0.0
    %1161 = vmatpush1.msra.mxu0 %v134
    %1162 = vmatprep.subr.mxu0 0.0
    %1163 = vmatpush1.msra.mxu0 %v135
    %1164 = vmatprep.subr.mxu0 0.0
    %1165 = vmatpush1.msra.mxu0 %v136
    %1166 = vmatprep.subr.mxu0 0.0
    %1167 = vmatpush1.msra.mxu0 %v137
    %1168 = vmatprep.subr.mxu0 0.0
    %1169 = vmatpush1.msra.mxu0 %v138
    %1170 = vmatprep.subr.mxu0 0.0
    %1171 = vmatpush1.msra.mxu0 %v139
    %1172 = vmatprep.subr.mxu0 0.0
    %1173 = vmatpush1.msra.mxu0 %v140
    %1174 = vmatprep.subr.mxu0 0.0
    %1175 = vmatpush1.msra.mxu0 %v141
    %1176 = vmatprep.subr.mxu0 0.0
    %1177 = vmatpush1.msra.mxu0 %v142
    %1178 = vmatprep.subr.mxu0 0.0
    %1179 = vmatpush1.msra.mxu0 %v143
    %1180 = vmatprep.subr.mxu0 0.0
    %1181 = vmatpush1.msra.mxu0 %v144
    %1182 = vmatprep.subr.mxu0 0.0
    %1183 = vmatpush1.msra.mxu0 %v145
    %1184 = vmatprep.subr.mxu0 0.0
    %1185 = vmatpush1.msra.mxu0 %v146
    %1186 = vmatprep.subr.mxu0 0.0
    %1187 = vmatpush1.msra.mxu0 %v147
    %1188 = vmatprep.subr.mxu0 0.0
    %1189 = vmatpush1.msra.mxu0 %v148
    %1190 = vmatprep.subr.mxu0 0.0
    %1191 = vmatpush1.msra.mxu0 %v149
    %1192 = vmatprep.subr.mxu0 0.0
    %1193 = vmatpush1.msra.mxu0 %v150
    %1194 = vmatprep.mubr.f32.mxu0 %v1054
    %1195 = vmatmul.mubr.f32.gmra.mrb[0].mxu0 %v1129
    %v1196 = vpop.f32.mrb[0].mxu0
    %v1197 = vadd.f32 %v156, %v1196
    %v1198 = vpop.f32.mrb[0].mxu0
    %1199 = vdwg.mxu0
    %v1200 = vtanh.pop %v1197
    %1201 = vst [vmem:[%s1056] sm:$0xff] %v1200
    %s1202 = scalar_lea.vmem [#allocation2], 48
    %v1203 = vld [vmem:[%s1202] sm:$0xff]
    %1204 = vmatprep.subr.mxu0 0.0
    %1205 = vmatpush1.msra.mxu0 %v102
    %1206 = vmatprep.subr.mxu0 0.0
    %1207 = vmatpush1.msra.mxu0 %v103
    %1208 = vmatprep.subr.mxu0 0.0
    %1209 = vmatpush1.msra.mxu0 %v104
    %1210 = vmatprep.subr.mxu0 0.0
    %1211 = vmatpush1.msra.mxu0 %v105
    %1212 = vmatprep.subr.mxu0 0.0
    %1213 = vmatpush1.msra.mxu0 %v106
    %1214 = vmatprep.subr.mxu0 0.0
    %1215 = vmatpush1.msra.mxu0 %v107
    %1216 = vmatprep.subr.mxu0 0.0
    %1217 = vmatpush1.msra.mxu0 %v108
    %1218 = vmatprep.subr.mxu0 0.0
    %1219 = vmatpush1.msra.mxu0 %v109
    %1220 = vmatprep.subr.mxu0 0.0
    %1221 = vmatpush1.msra.mxu0 %v110
    %1222 = vmatprep.subr.mxu0 0.0
    %1223 = vmatpush1.msra.mxu0 %v111
    %1224 = vmatprep.subr.mxu0 0.0
    %1225 = vmatpush1.msra.mxu0 %v112
    %1226 = vmatprep.subr.mxu0 0.0
    %1227 = vmatpush1.msra.mxu0 %v113
    %1228 = vmatprep.subr.mxu0 0.0
    %1229 = vmatpush1.msra.mxu0 %v114
    %1230 = vmatprep.subr.mxu0 0.0
    %1231 = vmatpush1.msra.mxu0 %v115
    %1232 = vmatprep.subr.mxu0 0.0
    %1233 = vmatpush1.msra.mxu0 %v116
    %1234 = vmatprep.subr.mxu0 0.0
    %1235 = vmatpush1.msra.mxu0 %v117
    %1236 = vmatprep.subr.mxu0 0.0
    %1237 = vmatpush1.msra.mxu0 0.0
    %1238 = vmatprep.subr.mxu0 0.0
    %1239 = vmatpush1.msra.mxu0 0.0
    %1240 = vmatprep.subr.mxu0 0.0
    %1241 = vmatpush1.msra.mxu0 0.0
    %1242 = vmatprep.subr.mxu0 0.0
    %1243 = vmatpush1.msra.mxu0 0.0
    %1244 = vmatprep.subr.mxu0 0.0
    %1245 = vmatpush1.msra.mxu0 0.0
    %1246 = vmatprep.subr.mxu0 0.0
    %1247 = vmatpush1.msra.mxu0 0.0
    %1248 = vmatprep.subr.mxu0 0.0
    %1249 = vmatpush1.msra.mxu0 0.0
    %1250 = vmatprep.subr.mxu0 0.0
    %1251 = vmatpush1.msra.mxu0 0.0
    %1252 = vmatprep.subr.mxu0 0.0
    %1253 = vmatpush1.msra.mxu0 0.0
    %1254 = vmatprep.subr.mxu0 0.0
    %1255 = vmatpush1.msra.mxu0 0.0
    %1256 = vmatprep.subr.mxu0 0.0
    %1257 = vmatpush1.msra.mxu0 0.0
    %1258 = vmatprep.subr.mxu0 0.0
    %1259 = vmatpush1.msra.mxu0 0.0
    %1260 = vmatprep.subr.mxu0 0.0
    %1261 = vmatpush1.msra.mxu0 0.0
    %1262 = vmatprep.subr.mxu0 0.0
    %1263 = vmatpush1.msra.mxu0 0.0
    %1264 = vmatprep.subr.mxu0 0.0
    %1265 = vmatpush1.msra.mxu0 0.0
    %1266 = vmatprep.subr.mxu0 0.0
    %1267 = vmatpush1.msra.mxu0 0.0
    %1268 = vmatprep.mubr.f32.mxu0 0.0
    %1269 = vmatmul.mubr.f32.gmra.mrb[0].mxu0 %v1129
    %v1270 = vpop.f32.mrb[0].mxu0
    %v1271 = vadd.f32 0.0, %v1270
    %v1272 = vpop.f32.mrb[0].mxu0
    %1273 = vdwg.mxu0
    %v1274 = vadd.f32 %v1203, %v1271
    %v1275 = vtanh.pop %v1274
    %1276 = vmatprep.subr.mxu0 0.0
    %1277 = vmatpush1.msra.mxu0 %v119
    %1278 = vmatprep.subr.mxu0 0.0
    %1279 = vmatpush1.msra.mxu0 %v120
    %1280 = vmatprep.subr.mxu0 0.0
    %1281 = vmatpush1.msra.mxu0 %v121
    %1282 = vmatprep.subr.mxu0 0.0
    %1283 = vmatpush1.msra.mxu0 %v122
    %1284 = vmatprep.subr.mxu0 0.0
    %1285 = vmatpush1.msra.mxu0 %v123
    %1286 = vmatprep.subr.mxu0 0.0
    %1287 = vmatpush1.msra.mxu0 %v124
    %1288 = vmatprep.subr.mxu0 0.0
    %1289 = vmatpush1.msra.mxu0 %v125
    %1290 = vmatprep.subr.mxu0 0.0
    %1291 = vmatpush1.msra.mxu0 %v126
    %1292 = vmatprep.subr.mxu0 0.0
    %1293 = vmatpush1.msra.mxu0 %v127
    %1294 = vmatprep.subr.mxu0 0.0
    %1295 = vmatpush1.msra.mxu0 %v128
    %1296 = vmatprep.subr.mxu0 0.0
    %1297 = vmatpush1.msra.mxu0 %v129
    %1298 = vmatprep.subr.mxu0 0.0
    %1299 = vmatpush1.msra.mxu0 %v130
    %1300 = vmatprep.subr.mxu0 0.0
    %1301 = vmatpush1.msra.mxu0 %v131
    %1302 = vmatprep.subr.mxu0 0.0
    %1303 = vmatpush1.msra.mxu0 %v132
    %1304 = vmatprep.subr.mxu0 0.0
    %1305 = vmatpush1.msra.mxu0 %v133
    %1306 = vmatprep.subr.mxu0 0.0
    %1307 = vmatpush1.msra.mxu0 %v134
    %1308 = vmatprep.subr.mxu0 0.0
    %1309 = vmatpush1.msra.mxu0 %v135
    %1310 = vmatprep.subr.mxu0 0.0
    %1311 = vmatpush1.msra.mxu0 %v136
    %1312 = vmatprep.subr.mxu0 0.0
    %1313 = vmatpush1.msra.mxu0 %v137
    %1314 = vmatprep.subr.mxu0 0.0
    %1315 = vmatpush1.msra.mxu0 %v138
    %1316 = vmatprep.subr.mxu0 0.0
    %1317 = vmatpush1.msra.mxu0 %v139
    %1318 = vmatprep.subr.mxu0 0.0
    %1319 = vmatpush1.msra.mxu0 %v140
    %1320 = vmatprep.subr.mxu0 0.0
    %1321 = vmatpush1.msra.mxu0 %v141
    %1322 = vmatprep.subr.mxu0 0.0
    %1323 = vmatpush1.msra.mxu0 %v142
    %1324 = vmatprep.subr.mxu0 0.0
    %1325 = vmatpush1.msra.mxu0 %v143
    %1326 = vmatprep.subr.mxu0 0.0
    %1327 = vmatpush1.msra.mxu0 %v144
    %1328 = vmatprep.subr.mxu0 0.0
    %1329 = vmatpush1.msra.mxu0 %v145
    %1330 = vmatprep.subr.mxu0 0.0
    %1331 = vmatpush1.msra.mxu0 %v146
    %1332 = vmatprep.subr.mxu0 0.0
    %1333 = vmatpush1.msra.mxu0 %v147
    %1334 = vmatprep.subr.mxu0 0.0
    %1335 = vmatpush1.msra.mxu0 %v148
    %1336 = vmatprep.subr.mxu0 0.0
    %1337 = vmatpush1.msra.mxu0 %v149
    %1338 = vmatprep.subr.mxu0 0.0
    %1339 = vmatpush1.msra.mxu0 %v150
    %1340 = vmatprep.mubr.f32.mxu0 %v1200
    %1341 = vmatmul.mubr.f32.gmra.mrb[0].mxu0 %v1275
    %v1342 = vpop.f32.mrb[0].mxu0
    %v1343 = vadd.f32 %v156, %v1342
    %v1344 = vpop.f32.mrb[0].mxu0
    %1345 = vdwg.mxu0
    %v1346 = vtanh.pop %v1343
    %1347 = vst [vmem:[%s1202] sm:$0xff] %v1346
    %s1348 = scalar_lea.vmem [#allocation2], 56
    %v1349 = vld [vmem:[%s1348] sm:$0xff]
    %1350 = vmatprep.subr.mxu0 0.0
    %1351 = vmatpush1.msra.mxu0 %v102
    %1352 = vmatprep.subr.mxu0 0.0
    %1353 = vmatpush1.msra.mxu0 %v103
    %1354 = vmatprep.subr.mxu0 0.0
    %1355 = vmatpush1.msra.mxu0 %v104
    %1356 = vmatprep.subr.mxu0 0.0
    %1357 = vmatpush1.msra.mxu0 %v105
    %1358 = vmatprep.subr.mxu0 0.0
    %1359 = vmatpush1.msra.mxu0 %v106
    %1360 = vmatprep.subr.mxu0 0.0
    %1361 = vmatpush1.msra.mxu0 %v107
    %1362 = vmatprep.subr.mxu0 0.0
    %1363 = vmatpush1.msra.mxu0 %v108
    %1364 = vmatprep.subr.mxu0 0.0
    %1365 = vmatpush1.msra.mxu0 %v109
    %1366 = vmatprep.subr.mxu0 0.0
    %1367 = vmatpush1.msra.mxu0 %v110
    %1368 = vmatprep.subr.mxu0 0.0
    %1369 = vmatpush1.msra.mxu0 %v111
    %1370 = vmatprep.subr.mxu0 0.0
    %1371 = vmatpush1.msra.mxu0 %v112
    %1372 = vmatprep.subr.mxu0 0.0
    %1373 = vmatpush1.msra.mxu0 %v113
    %1374 = vmatprep.subr.mxu0 0.0
    %1375 = vmatpush1.msra.mxu0 %v114
    %1376 = vmatprep.subr.mxu0 0.0
    %1377 = vmatpush1.msra.mxu0 %v115
    %1378 = vmatprep.subr.mxu0 0.0
    %1379 = vmatpush1.msra.mxu0 %v116
    %1380 = vmatprep.subr.mxu0 0.0
    %1381 = vmatpush1.msra.mxu0 %v117
    %1382 = vmatprep.subr.mxu0 0.0
    %1383 = vmatpush1.msra.mxu0 0.0
    %1384 = vmatprep.subr.mxu0 0.0
    %1385 = vmatpush1.msra.mxu0 0.0
    %1386 = vmatprep.subr.mxu0 0.0
    %1387 = vmatpush1.msra.mxu0 0.0
    %1388 = vmatprep.subr.mxu0 0.0
    %1389 = vmatpush1.msra.mxu0 0.0
    %1390 = vmatprep.subr.mxu0 0.0
    %1391 = vmatpush1.msra.mxu0 0.0
    %1392 = vmatprep.subr.mxu0 0.0
    %1393 = vmatpush1.msra.mxu0 0.0
    %1394 = vmatprep.subr.mxu0 0.0
    %1395 = vmatpush1.msra.mxu0 0.0
    %1396 = vmatprep.subr.mxu0 0.0
    %1397 = vmatpush1.msra.mxu0 0.0
    %1398 = vmatprep.subr.mxu0 0.0
    %1399 = vmatpush1.msra.mxu0 0.0
    %1400 = vmatprep.subr.mxu0 0.0
    %1401 = vmatpush1.msra.mxu0 0.0
    %1402 = vmatprep.subr.mxu0 0.0
    %1403 = vmatpush1.msra.mxu0 0.0
    %1404 = vmatprep.subr.mxu0 0.0
    %1405 = vmatpush1.msra.mxu0 0.0
    %1406 = vmatprep.subr.mxu0 0.0
    %1407 = vmatpush1.msra.mxu0 0.0
    %1408 = vmatprep.subr.mxu0 0.0
    %1409 = vmatpush1.msra.mxu0 0.0
    %1410 = vmatprep.subr.mxu0 0.0
    %1411 = vmatpush1.msra.mxu0 0.0
    %1412 = vmatprep.subr.mxu0 0.0
    %1413 = vmatpush1.msra.mxu0 0.0
    %1414 = vmatprep.mubr.f32.mxu0 0.0
    %1415 = vmatmul.mubr.f32.gmra.mrb[0].mxu0 %v1275
    %v1416 = vpop.f32.mrb[0].mxu0
    %v1417 = vadd.f32 0.0, %v1416
    %v1418 = vpop.f32.mrb[0].mxu0
    %1419 = vdwg.mxu0
    %v1420 = vadd.f32 %v1349, %v1417
    %v1421 = vtanh.pop %v1420
    %1422 = vmatprep.subr.mxu0 0.0
    %1423 = vmatpush1.msra.mxu0 %v119
    %1424 = vmatprep.subr.mxu0 0.0
    %1425 = vmatpush1.msra.mxu0 %v120
    %1426 = vmatprep.subr.mxu0 0.0
    %1427 = vmatpush1.msra.mxu0 %v121
    %1428 = vmatprep.subr.mxu0 0.0
    %1429 = vmatpush1.msra.mxu0 %v122
    %1430 = vmatprep.subr.mxu0 0.0
    %1431 = vmatpush1.msra.mxu0 %v123
    %1432 = vmatprep.subr.mxu0 0.0
    %1433 = vmatpush1.msra.mxu0 %v124
    %1434 = vmatprep.subr.mxu0 0.0
    %1435 = vmatpush1.msra.mxu0 %v125
    %1436 = vmatprep.subr.mxu0 0.0
    %1437 = vmatpush1.msra.mxu0 %v126
    %1438 = vmatprep.subr.mxu0 0.0
    %1439 = vmatpush1.msra.mxu0 %v127
    %1440 = vmatprep.subr.mxu0 0.0
    %1441 = vmatpush1.msra.mxu0 %v128
    %1442 = vmatprep.subr.mxu0 0.0
    %1443 = vmatpush1.msra.mxu0 %v129
    %1444 = vmatprep.subr.mxu0 0.0
    %1445 = vmatpush1.msra.mxu0 %v130
    %1446 = vmatprep.subr.mxu0 0.0
    %1447 = vmatpush1.msra.mxu0 %v131
    %1448 = vmatprep.subr.mxu0 0.0
    %1449 = vmatpush1.msra.mxu0 %v132
    %1450 = vmatprep.subr.mxu0 0.0
    %1451 = vmatpush1.msra.mxu0 %v133
    %1452 = vmatprep.subr.mxu0 0.0
    %1453 = vmatpush1.msra.mxu0 %v134
    %1454 = vmatprep.subr.mxu0 0.0
    %1455 = vmatpush1.msra.mxu0 %v135
    %1456 = vmatprep.subr.mxu0 0.0
    %1457 = vmatpush1.msra.mxu0 %v136
    %1458 = vmatprep.subr.mxu0 0.0
    %1459 = vmatpush1.msra.mxu0 %v137
    %1460 = vmatprep.subr.mxu0 0.0
    %1461 = vmatpush1.msra.mxu0 %v138
    %1462 = vmatprep.subr.mxu0 0.0
    %1463 = vmatpush1.msra.mxu0 %v139
    %1464 = vmatprep.subr.mxu0 0.0
    %1465 = vmatpush1.msra.mxu0 %v140
    %1466 = vmatprep.subr.mxu0 0.0
    %1467 = vmatpush1.msra.mxu0 %v141
    %1468 = vmatprep.subr.mxu0 0.0
    %1469 = vmatpush1.msra.mxu0 %v142
    %1470 = vmatprep.subr.mxu0 0.0
    %1471 = vmatpush1.msra.mxu0 %v143
    %1472 = vmatprep.subr.mxu0 0.0
    %1473 = vmatpush1.msra.mxu0 %v144
    %1474 = vmatprep.subr.mxu0 0.0
    %1475 = vmatpush1.msra.mxu0 %v145
    %1476 = vmatprep.subr.mxu0 0.0
    %1477 = vmatpush1.msra.mxu0 %v146
    %1478 = vmatprep.subr.mxu0 0.0
    %1479 = vmatpush1.msra.mxu0 %v147
    %1480 = vmatprep.subr.mxu0 0.0
    %1481 = vmatpush1.msra.mxu0 %v148
    %1482 = vmatprep.subr.mxu0 0.0
    %1483 = vmatpush1.msra.mxu0 %v149
    %1484 = vmatprep.subr.mxu0 0.0
    %1485 = vmatpush1.msra.mxu0 %v150
    %1486 = vmatprep.mubr.f32.mxu0 %v1346
    %1487 = vmatmul.mubr.f32.gmra.mrb[0].mxu0 %v1421
    %v1488 = vpop.f32.mrb[0].mxu0
    %v1489 = vadd.f32 %v156, %v1488
    %v1490 = vpop.f32.mrb[0].mxu0
    %1491 = vdwg.mxu0
    %v1492 = vtanh.pop %v1489
    %1493 = vst [vmem:[%s1348] sm:$0xff] %v1492
    %v1494 = vld [vmem:[#allocation2] sm:$0xff]
    %v1495 = vld [vmem:[#allocation2 + $0x8] sm:$0xff]
    %v1496 = vld [vmem:[#allocation2 + $0x10] sm:$0xff]
    %v1497 = vld [vmem:[#allocation2 + $0x18] sm:$0xff]
    %v1498 = vld [vmem:[#allocation2 + $0x20] sm:$0xff]
    %v1499 = vld [vmem:[#allocation2 + $0x28] sm:$0xff]
    %v1500 = vld [vmem:[#allocation2 + $0x30] sm:$0xff]
    %v1501 = vld [vmem:[#allocation2 + $0x38] sm:$0xff]
    %v1503 = vlaneseq
    %v1504 = vshrl.u32 %v1503, 7
    %v1505 = vsub.s32 0, %v1504
    %v1506 = vrot.slane %v174, %v1505
    %1508 = vmatprep.subr.mxu0 0.0
    %1509 = vmatpush1.msra.mxu0 %v158
    %1510 = vmatprep.subr.mxu0 0.0
    %1511 = vmatpush1.msra.mxu0 %v159
    %1512 = vmatprep.subr.mxu0 0.0
    %1513 = vmatpush1.msra.mxu0 %v160
    %1514 = vmatprep.subr.mxu0 0.0
    %1515 = vmatpush1.msra.mxu0 %v161
    %1516 = vmatprep.subr.mxu0 0.0
    %1517 = vmatpush1.msra.mxu0 %v162
    %1518 = vmatprep.subr.mxu0 0.0
    %1519 = vmatpush1.msra.mxu0 %v163
    %1520 = vmatprep.subr.mxu0 0.0
    %1521 = vmatpush1.msra.mxu0 %v164
    %1522 = vmatprep.subr.mxu0 0.0
    %1523 = vmatpush1.msra.mxu0 %v165
    %1524 = vmatprep.subr.mxu0 0.0
    %1525 = vmatpush1.msra.mxu0 %v166
    %1526 = vmatprep.subr.mxu0 0.0
    %1527 = vmatpush1.msra.mxu0 %v167
    %1528 = vmatprep.subr.mxu0 0.0
    %1529 = vmatpush1.msra.mxu0 %v168
    %1530 = vmatprep.subr.mxu0 0.0
    %1531 = vmatpush1.msra.mxu0 %v169
    %1532 = vmatprep.subr.mxu0 0.0
    %1533 = vmatpush1.msra.mxu0 %v170
    %1534 = vmatprep.subr.mxu0 0.0
    %1535 = vmatpush1.msra.mxu0 %v171
    %1536 = vmatprep.subr.mxu0 0.0
    %1537 = vmatpush1.msra.mxu0 %v172
    %1538 = vmatprep.subr.mxu0 0.0
    %1539 = vmatpush1.msra.mxu0 %v173
    %1540 = vmatprep.subr.mxu0 0.0
    %1541 = vmatpush1.msra.mxu0 0.0
    %1542 = vmatprep.subr.mxu0 0.0
    %1543 = vmatpush1.msra.mxu0 0.0
    %1544 = vmatprep.subr.mxu0 0.0
    %1545 = vmatpush1.msra.mxu0 0.0
    %1546 = vmatprep.subr.mxu0 0.0
    %1547 = vmatpush1.msra.mxu0 0.0
    %1548 = vmatprep.subr.mxu0 0.0
    %1549 = vmatpush1.msra.mxu0 0.0
    %1550 = vmatprep.subr.mxu0 0.0
    %1551 = vmatpush1.msra.mxu0 0.0
    %1552 = vmatprep.subr.mxu0 0.0
    %1553 = vmatpush1.msra.mxu0 0.0
    %1554 = vmatprep.subr.mxu0 0.0
    %1555 = vmatpush1.msra.mxu0 0.0
    %1556 = vmatprep.subr.mxu0 0.0
    %1557 = vmatpush1.msra.mxu0 0.0
    %1558 = vmatprep.subr.mxu0 0.0
    %1559 = vmatpush1.msra.mxu0 0.0
    %1560 = vmatprep.subr.mxu0 0.0
    %1561 = vmatpush1.msra.mxu0 0.0
    %1562 = vmatprep.subr.mxu0 0.0
    %1563 = vmatpush1.msra.mxu0 0.0
    %1564 = vmatprep.subr.mxu0 0.0
    %1565 = vmatpush1.msra.mxu0 0.0
    %1566 = vmatprep.subr.mxu0 0.0
    %1567 = vmatpush1.msra.mxu0 0.0
    %1568 = vmatprep.subr.mxu0 0.0
    %1569 = vmatpush1.msra.mxu0 0.0
    %1570 = vmatprep.subr.mxu0 0.0
    %1571 = vmatpush1.msra.mxu0 0.0
    %1572 = vmatprep.mubr.f32.mxu0 0.0
    %1573 = vmatmul.mubr.f32.gmra.mrb[0].mxu0 %v1494
    %v1574 = vpop.f32.mrb[0].mxu0
    %v1575 = vadd.f32 %v1506, %v1574
    %v1576 = vpop.f32.mrb[0].mxu0
    %1577 = vmatprep.mubr.f32.mxu0 0.0
    %1578 = vmatmul.mubr.f32.gmra.mrb[0].mxu0 %v1495
    %v1579 = vpop.f32.mrb[0].mxu0
    %v1580 = vadd.f32 %v1506, %v1579
    %v1581 = vpop.f32.mrb[0].mxu0
    %1582 = vmatprep.mubr.f32.mxu0 0.0
    %1583 = vmatmul.mubr.f32.gmra.mrb[0].mxu0 %v1496
    %v1584 = vpop.f32.mrb[0].mxu0
    %v1585 = vadd.f32 %v1506, %v1584
    %v1586 = vpop.f32.mrb[0].mxu0
    %1587 = vmatprep.mubr.f32.mxu0 0.0
    %1588 = vmatmul.mubr.f32.gmra.mrb[0].mxu0 %v1497
    %v1589 = vpop.f32.mrb[0].mxu0
    %v1590 = vadd.f32 %v1506, %v1589
    %v1591 = vpop.f32.mrb[0].mxu0
    %1592 = vmatprep.mubr.f32.mxu0 0.0
    %1593 = vmatmul.mubr.f32.gmra.mrb[0].mxu0 %v1498
    %v1594 = vpop.f32.mrb[0].mxu0
    %v1595 = vadd.f32 %v1506, %v1594
    %v1596 = vpop.f32.mrb[0].mxu0
    %1597 = vmatprep.mubr.f32.mxu0 0.0
    %1598 = vmatmul.mubr.f32.gmra.mrb[0].mxu0 %v1499
    %v1599 = vpop.f32.mrb[0].mxu0
    %v1600 = vadd.f32 %v1506, %v1599
    %v1601 = vpop.f32.mrb[0].mxu0
    %1602 = vmatprep.mubr.f32.mxu0 0.0
    %1603 = vmatmul.mubr.f32.gmra.mrb[0].mxu0 %v1500
    %v1604 = vpop.f32.mrb[0].mxu0
    %v1605 = vadd.f32 %v1506, %v1604
    %v1606 = vpop.f32.mrb[0].mxu0
    %1607 = vmatprep.mubr.f32.mxu0 0.0
    %1608 = vmatmul.mubr.f32.gmra.mrb[0].mxu0 %v1501
    %v1609 = vpop.f32.mrb[0].mxu0
    %v1610 = vadd.f32 %v1506, %v1609
    %v1611 = vpop.f32.mrb[0].mxu0
    %1612 = vdwg.mxu0
    %v1613 = vxor.u32 %v1575, 2147483648
    %v1614 = vxor.u32 %v1580, 2147483648
    %v1615 = vxor.u32 %v1585, 2147483648
    %v1616 = vxor.u32 %v1590, 2147483648
    %v1617 = vxor.u32 %v1595, 2147483648
    %v1618 = vxor.u32 %v1600, 2147483648
    %v1619 = vxor.u32 %v1605, 2147483648
    %v1620 = vxor.u32 %v1610, 2147483648
    %v1621 = vmul.f32 %v1613, 1.442695
    %v1622 = vpow.pop %v1621
    %v1623 = vmul.f32 %v1614, 1.442695
    %v1624 = vpow.pop %v1623
    %v1625 = vmul.f32 %v1615, 1.442695
    %v1626 = vpow.pop %v1625
    %v1627 = vmul.f32 %v1616, 1.442695
    %v1628 = vpow.pop %v1627
    %v1629 = vmul.f32 %v1617, 1.442695
    %v1630 = vpow.pop %v1629
    %v1631 = vmul.f32 %v1618, 1.442695
    %v1632 = vpow.pop %v1631
    %v1633 = vmul.f32 %v1619, 1.442695
    %v1634 = vpow.pop %v1633
    %v1635 = vmul.f32 %v1620, 1.442695
    %v1636 = vpow.pop %v1635
    %v1637 = vadd.f32 %v1622, 1.0
    %v1638 = vadd.f32 %v1624, 1.0
    %v1639 = vadd.f32 %v1626, 1.0
    %v1640 = vadd.f32 %v1628, 1.0
    %v1641 = vadd.f32 %v1630, 1.0
    %v1642 = vadd.f32 %v1632, 1.0
    %v1643 = vadd.f32 %v1634, 1.0
    %v1644 = vadd.f32 %v1636, 1.0
    %v1645 = vrcp.pop %v1637
    %v1646 = vmul.f32 1.0, %v1645
    %v1647 = vrcp.pop %v1638
    %v1648 = vmul.f32 1.0, %v1647
    %v1649 = vrcp.pop %v1639
    %v1650 = vmul.f32 1.0, %v1649
    %v1651 = vrcp.pop %v1640
    %v1652 = vmul.f32 1.0, %v1651
    %v1653 = vrcp.pop %v1641
    %v1654 = vmul.f32 1.0, %v1653
    %v1655 = vrcp.pop %v1642
    %v1656 = vmul.f32 1.0, %v1655
    %v1657 = vrcp.pop %v1643
    %v1658 = vmul.f32 1.0, %v1657
    %v1659 = vrcp.pop %v1644
    %v1660 = vmul.f32 1.0, %v1659
    %1661 = vst [vmem:[#allocation12] sm:$0xff] %v1646
    %1662 = vst [vmem:[#allocation12 + $0x8] sm:$0xff] %v1648
    %1663 = vst [vmem:[#allocation12 + $0x10] sm:$0xff] %v1650
    %1664 = vst [vmem:[#allocation12 + $0x18] sm:$0xff] %v1652
    %1665 = vst [vmem:[#allocation12 + $0x20] sm:$0xff] %v1654
    %1666 = vst [vmem:[#allocation12 + $0x28] sm:$0xff] %v1656
    %1667 = vst [vmem:[#allocation12 + $0x30] sm:$0xff] %v1658
    %1668 = vst [vmem:[#allocation12 + $0x38] sm:$0xff] %v1660
    // Predicated region
    $region54: #{tpu_custom_call.1} parent=1 // pred_check
      _
    $region55: #{tpu_custom_call.1} parent=1 // pred_check_branch
      %1670 = sbr.rel (0) target = $region57
    $region56: #{tpu_custom_call.1} parent=1 // pred_region
      %s1672 = ssub.s32 1024, 1024
      %1673 = vsyncadd [#allocation5], %s1672
      %s1674 = sshll.u32 [#allocation12], 4
      %s1675 = int_to_ptr.vmem [resolvable:$true] %s1674
      %1680 = dma.vmem_to_hbm [thread:$0]  %s1675, 1024, %s8, [#allocation5], 128, 128, 8
    $region57: #{tpu_custom_call.1} parent=1 // pred_fallthru
      _
    // Predicated region
    $region58: #{tpu_custom_call.1} parent=1 // pred_check
      _
    $region59: #{tpu_custom_call.1} parent=1 // pred_check_branch
      %1682 = sbr.rel (0) target = $region61
    $region60: #{tpu_custom_call.1} parent=1 // pred_region
      %1683 = dma.done [#allocation5], 1024
    $region61: #{tpu_custom_call.1} parent=1 // pred_fallthru
      _
    %1684 = vsyncpa [#allocation4], 1
    %1685 = vsyncpa [#allocation7], 1
    %1686 = vsyncpa [#allocation10], 1
    %1687 = vsyncpa [#allocation5], 1

</llo_original>
